<compile_context>
chip_gen: v7x
topology: tpu7x:2x2x1
jax: 0.10.0
libtpu: 0.0.40
codegen_flags: <defaults>
</compile_context>

<pallas_src>
import functools

import jax
import jax.numpy as jnp
from jax.experimental import pallas as pl
from jax.experimental.pallas import tpu as pltpu

EPS = 1e-5
_VMEM_LIMIT_BYTES = 48 * 1024 * 1024   # raised scoped-VMEM limit (< v7x 64 MiB physical)
_TILE_VMEM_BUDGET = 20 * 1024 * 1024   # per-pass working-set budget for the tile picker


# ----------------------------- in-kernel helpers ------------------------------


def _elu(h):
    # ELU (alpha=1) with a single EUP transcendental on the negative branch.
    # Cancellation of exp(x)-1 near zero is ~1e-7 absolute: far below BN noise.
    return jnp.where(h > 0, h, jnp.exp(jnp.minimum(h, 0.0)) - 1.0)


def _write_stats(s_ref, h):
    # Per-tile partial BatchNorm statistics: [sum, sum of squares] per channel.
    # Each grid step owns its own (C, 2) block => the grid axis stays "parallel".
    s_ref[:, 0:1] = jnp.sum(h, axis=1, keepdims=True)
    s_ref[:, 1:2] = jnp.sum(h * h, axis=1, keepdims=True)


# ----------------------------- wrapper-side helpers ----------------------------


def _bn_affine(partial_stats, gamma, beta, n_cols):
    """Fold training-mode BatchNorm into per-channel (A, B) with  y = h*A + B.

    partial_stats: (num_tiles, C, 2).  The tiny cross-tile reduce and the fold
    run in plain JAX between the Pallas passes.  Conv biases are omitted in the
    kernels because BN's mean absorbs the per-channel constant exactly:
    (h + b) - mean(h + b) == h - mean(h).
    """
    s = jnp.sum(partial_stats.astype(jnp.float32), axis=0)            # (C, 2)
    mean = s[:, 0] / n_cols
    var = jnp.maximum(s[:, 1] / n_cols - mean * mean, 0.0)            # biased variance
    a = gamma.astype(jnp.float32) * jax.lax.rsqrt(var + EPS)
    b = beta.astype(jnp.float32) - mean * a
    return jnp.stack([a, b], axis=1)                                  # (C, 2)


def _per_col_bytes(Cin, Cmid, Cout3, act_bytes):
    # Conservative per-lane-column VMEM estimate of the heaviest pass
    # (double-buffered ins/outs + in-kernel f32 temporaries).
    f32b = 4
    p1 = 2 * Cin * f32b + 2 * Cmid * act_bytes + 3 * Cmid * f32b
    p2 = 4 * Cmid * act_bytes + 9 * Cmid * f32b + 4 * f32b            # conv2: a/prev/nxt/cat
    p3 = 2 * Cmid * act_bytes + 2 * Cout3 * act_bytes + (2 * Cmid + 2 * Cout3) * f32b
    p4 = 2 * Cout3 * act_bytes + 7 * Cin * f32b
    return max(p1, p2, p3, p4)


def _pick_seqs_per_tile(N, L, target_cols, per_col_bytes, budget_bytes):
    """Whole sequences per row tile (tile lane width = g*L, so conv2 needs no halo).

    Prefers the widest 128-aligned tile within both the lane target and the VMEM
    budget; falls back to the widest in-budget divisor (masked stores, still
    correct) when no 128-aligned divisor of N*L exists.
    """
    target = max(target_cols, L)
    divisors = [g for g in range(1, N + 1) if N % g == 0]
    in_budget = [g for g in divisors
                 if g * L <= target and g * L * per_col_bytes <= budget_bytes]
    aligned = [g for g in in_budget if (g * L) % 128 == 0]
    if aligned:
        return max(aligned)
    if in_budget:
        return max(in_budget)
    # TODO(synk): intra-sequence tiling with a 1-column halo when even a single
    # sequence exceeds the VMEM budget.
    return 1


# ------------------------------- forward wrapper -------------------------------


def decoder_bottleneck_forward(x_ncl, params, *, act_dtype=jnp.float32,
                               target_tile_cols=16384):
    """x_ncl: (N, Cin, L) float32; params: dict of PyTorch-shaped weights.

    act_dtype controls only the storage dtype of the HBM-resident intermediates
    h1/h2/h3 (use bfloat16 to halve that traffic, including on v5e); all matmul,
    BN and ELU math stays in float32.
    """
    N, Cin, L = x_ncl.shape
    R = N * L
    f32 = jnp.float32

    W1 = params["W1"][:, :, 0]                 # (Cin, Cmid)
    W2 = params["W2"]                          # (Cmid, Cmid, 3)
    W3 = params["W3"][:, :, 0]                 # (Cmid, Cout3)
    Cmid, Cout3 = W1.shape[1], W3.shape[1]
    assert Cout3 == Cin, "residual add needs in_channels == out_channels*expansion"

    # Weights transposed for the channel-major (C, R) layout; fused conv2 weight
    # with taps ordered [prev | center | next].  All dots stay f32.
    w1t = W1.T.astype(f32)                                             # (Cmid, Cin)
    w2t = jnp.concatenate([W2[:, :, 2].T, W2[:, :, 1].T, W2[:, :, 0].T],
                          axis=1).astype(f32)                          # (Cmid, 3*Cmid)
    w3t = W3.T.astype(f32)                                             # (Cout3, Cmid)

    # Channel-major activations: column r = n*L + l (R sits on the 128-wide lanes).
    x_cm = jnp.transpose(x_ncl, (1, 0, 2)).reshape(Cin, R).astype(f32)

    act_bytes = jnp.dtype(act_dtype).itemsize
    G = _pick_seqs_per_tile(N, L, target_tile_cols,
                            _per_col_bytes(Cin, Cmid, Cout3, act_bytes),
                            _TILE_VMEM_BUDGET)
    T = G * L
    nt = R // T

    # conv2 boundary masks: zero the "prev" neighbour at l==0 and "next" at l==L-1.
    # Tiles hold whole sequences, so the same (2, T) pattern applies to every tile.
    l_idx = jnp.arange(L)
    keep = jnp.stack([jnp.where(l_idx == 0, 0.0, 1.0),
                      jnp.where(l_idx == L - 1, 0.0, 1.0)]).astype(f32)
    keep = jnp.tile(keep, (1, G))                                      # (2, T)

    col_spec = lambda c: pl.BlockSpec((c, T), lambda t: (0, t))
    full_spec = lambda a: pl.BlockSpec(a.shape, lambda t: (0,) * a.ndim)
    stat_spec = lambda c: pl.BlockSpec((None, c, 2), lambda t: (t, 0, 0))
    cparams = pltpu.CompilerParams(dimension_semantics=("parallel",),
                                   vmem_limit_bytes=_VMEM_LIMIT_BYTES)

    # ---- pass 1: conv1 (k=1 channel matmul), per-tile BN1 partial stats --------
    def k_conv1(x_ref, w_ref, h_ref, s_ref):
        h = jnp.dot(w_ref[...], x_ref[...], preferred_element_type=f32)
        _write_stats(s_ref, h)
        h_ref[...] = h.astype(h_ref.dtype)

    h1, s1p = pl.pallas_call(
        k_conv1,
        grid=(nt,),
        in_specs=[col_spec(Cin), full_spec(w1t)],
        out_specs=(col_spec(Cmid), stat_spec(Cmid)),
        out_shape=(jax.ShapeDtypeStruct((Cmid, R), act_dtype),
                   jax.ShapeDtypeStruct((nt, Cmid, 2), f32)),
        compiler_params=cparams,
    )(x_cm, w1t)

    aff1 = _bn_affine(s1p, params["g1"], params["be1"], R)            # (Cmid, 2)

    # ---- pass 2: BN1+ELU, fused 3-tap conv2, per-tile BN2 partial stats --------
    def k_conv2(aff_ref, keep_ref, h1_ref, w_ref, h_ref, s_ref):
        a = _elu(h1_ref[...].astype(f32) * aff_ref[:, 0:1] + aff_ref[:, 1:2])
        prev = pltpu.roll(a, shift=1, axis=1) * keep_ref[0:1, :]       # a[:, r-1]
        nxt = pltpu.roll(a, shift=T - 1, axis=1) * keep_ref[1:2, :]    # a[:, r+1]
        if Cmid % 8 == 0:
            # fused: one MXU pass with a 3x larger contraction dim
            cat = jnp.concatenate([prev, a, nxt], axis=0)              # (3*Cmid, T)
            h = jnp.dot(w_ref[...], cat, preferred_element_type=f32)
        else:  # sublane-unaligned concat fallback: three separate matmuls
            h = (jnp.dot(w_ref[:, :Cmid], prev, preferred_element_type=f32)
                 + jnp.dot(w_ref[:, Cmid:2 * Cmid], a, preferred_element_type=f32)
                 + jnp.dot(w_ref[:, 2 * Cmid:], nxt, preferred_element_type=f32))
        _write_stats(s_ref, h)
        h_ref[...] = h.astype(h_ref.dtype)

    h2, s2p = pl.pallas_call(
        k_conv2,
        grid=(nt,),
        in_specs=[full_spec(aff1), full_spec(keep), col_spec(Cmid), full_spec(w2t)],
        out_specs=(col_spec(Cmid), stat_spec(Cmid)),
        out_shape=(jax.ShapeDtypeStruct((Cmid, R), act_dtype),
                   jax.ShapeDtypeStruct((nt, Cmid, 2), f32)),
        compiler_params=cparams,
    )(aff1, keep, h1, w2t)

    aff2 = _bn_affine(s2p, params["g2"], params["be2"], R)

    # ---- pass 3: BN2+ELU, conv3 (k=1), per-tile BN3 partial stats ---------------
    def k_conv3(aff_ref, h2_ref, w_ref, h_ref, s_ref):
        a = _elu(h2_ref[...].astype(f32) * aff_ref[:, 0:1] + aff_ref[:, 1:2])
        h = jnp.dot(w_ref[...], a, preferred_element_type=f32)
        _write_stats(s_ref, h)
        h_ref[...] = h.astype(h_ref.dtype)

    h3, s3p = pl.pallas_call(
        k_conv3,
        grid=(nt,),
        in_specs=[full_spec(aff2), col_spec(Cmid), full_spec(w3t)],
        out_specs=(col_spec(Cout3), stat_spec(Cout3)),
        out_shape=(jax.ShapeDtypeStruct((Cout3, R), act_dtype),
                   jax.ShapeDtypeStruct((nt, Cout3, 2), f32)),
        compiler_params=cparams,
    )(aff2, h2, w3t)

    aff3 = _bn_affine(s3p, params["g3"], params["be3"], R)

    # ---- pass 4: BN3 affine, residual add, final ELU ----------------------------
    def k_out(aff_ref, h3_ref, x_ref, o_ref):
        y = h3_ref[...].astype(f32) * aff_ref[:, 0:1] + aff_ref[:, 1:2] + x_ref[...]
        o_ref[...] = _elu(y).astype(o_ref.dtype)

    out_cm = pl.pallas_call(
        k_out,
        grid=(nt,),
        in_specs=[full_spec(aff3), col_spec(Cout3), col_spec(Cin)],
        out_specs=col_spec(Cin),
        out_shape=jax.ShapeDtypeStruct((Cin, R), f32),
        compiler_params=cparams,
    )(aff3, h3, x_cm)

    # back to PyTorch's (N, C, L) layout
    return jnp.transpose(out_cm.reshape(Cin, N, L), (1, 0, 2))


# ----------------- pure-JAX reference (direct ConvTranspose1d) -----------------


def _conv_transpose1d_ref(x, W, b, padding):
    # x: (N, Cin, L); W: (Cin, Cout, K); stride=1, output_padding=0
    N, Cin, L = x.shape
    K = W.shape[2]
    out = jnp.zeros((N, W.shape[1], L), jnp.float32)
    for kk in range(K):
        shift = padding - kk          # out[j] += x[j + shift] @ W[:, :, kk]
        if shift >= 0:
            xs = jnp.pad(x[:, :, shift:], ((0, 0), (0, 0), (0, shift)))
        else:
            xs = jnp.pad(x[:, :, : L + shift], ((0, 0), (0, 0), (-shift, 0)))
        out = out + jnp.einsum("ncl,cd->ndl", xs, W[:, :, kk])
    return out + b[None, :, None]


def _bn_ref(h, gamma, beta):
    mean = h.mean(axis=(0, 2), keepdims=True)
    var = ((h - mean) ** 2).mean(axis=(0, 2), keepdims=True)
    return (h - mean) / jnp.sqrt(var + EPS) * gamma[None, :, None] + beta[None, :, None]


def _elu_ref(h):
    return jnp.where(h > 0, h, jnp.expm1(jnp.minimum(h, 0.0)))


def reference_forward(x, params):
    identity = x
    h = _elu_ref(_bn_ref(_conv_transpose1d_ref(x, params["W1"], params["b1"], 0),
                         params["g1"], params["be1"]))
    h = _elu_ref(_bn_ref(_conv_transpose1d_ref(h, params["W2"], params["b2"], 1),
                         params["g2"], params["be2"]))
    h = _bn_ref(_conv_transpose1d_ref(h, params["W3"], params["b3"], 0),
                params["g3"], params["be3"])
    return _elu_ref(h + identity)


# --------------------------------- params init ---------------------------------


def init_params(key, in_channels, out_channels, expansion=4):
    Cin, Cmid = in_channels, out_channels
    Cout3 = out_channels * expansion
    ks = jax.random.split(key, 12)
    return {
        # ConvTranspose1d weights have shape (in_channels, out_channels, k)
        "W1": 0.2 * jax.random.normal(ks[0], (Cin, Cmid, 1), jnp.float32),
        "b1": 0.1 * jax.random.normal(ks[1], (Cmid,), jnp.float32),
        "g1": 1.0 + 0.05 * jax.random.normal(ks[2], (Cmid,), jnp.float32),
        "be1": 0.05 * jax.random.normal(ks[3], (Cmid,), jnp.float32),
        "W2": 0.2 * jax.random.normal(ks[4], (Cmid, Cmid, 3), jnp.float32),
        "b2": 0.1 * jax.random.normal(ks[5], (Cmid,), jnp.float32),
        "g2": 1.0 + 0.05 * jax.random.normal(ks[6], (Cmid,), jnp.float32),
        "be2": 0.05 * jax.random.normal(ks[7], (Cmid,), jnp.float32),
        "W3": 0.2 * jax.random.normal(ks[8], (Cmid, Cout3, 1), jnp.float32),
        "b3": 0.1 * jax.random.normal(ks[9], (Cout3,), jnp.float32),
        "g3": 1.0 + 0.05 * jax.random.normal(ks[10], (Cout3,), jnp.float32),
        "be3": 0.05 * jax.random.normal(ks[11], (Cout3,), jnp.float32),
    }


if __name__ == "__main__":
    # Small shapes consistent with the module (in_channels = out_channels * 4).
    # N*L = 256 so row tiling produces lane-aligned (multiple-of-128) tiles.
    N, Cin, L = 16, 32, 16
    out_channels = Cin // 4                     # 8

    key = jax.random.PRNGKey(0)
    kx, kp = jax.random.split(key)
    x = jax.random.normal(kx, (N, Cin, L), jnp.float32)
    params = init_params(kp, Cin, out_channels)

    y_ref = reference_forward(x, params)

    # f32 intermediates, forced into 2 row tiles (exercises the cross-tile
    # partial-stats reduction and in-tile multi-sequence roll masking).
    fwd_f32 = jax.jit(functools.partial(decoder_bottleneck_forward,
                                        act_dtype=jnp.float32,
                                        target_tile_cols=128))
    y = jax.block_until_ready(fwd_f32(x, params))
    assert y.shape == (N, Cin, L)
    if not jnp.allclose(y, y_ref, atol=2e-4, rtol=2e-4):
        max_err = jnp.max(jnp.abs(y - y_ref))
        raise AssertionError(f"f32 kernel/reference mismatch, max_err={max_err}")

    # bf16 *storage* path (HBM-traffic lever on all generations incl. v5e):
    # bf16 h1/h2/h3 intermediates, all matmul/BN/ELU math stays f32.
    fwd_bf16 = jax.jit(functools.partial(decoder_bottleneck_forward,
                                         act_dtype=jnp.bfloat16))
    y16 = jax.block_until_ready(fwd_bf16(x, params))
    if not jnp.allclose(y16, y_ref, atol=5e-2, rtol=5e-2):
        max_err = jnp.max(jnp.abs(y16 - y_ref))
        raise AssertionError(f"bf16 kernel/reference mismatch, max_err={max_err}")

    print("KERNEL_OK")
</pallas_src>

<mosaic_0001>
module attributes {stable_mosaic.version = 11 : i64} {
  func.func @k_conv3(%arg0: i32, %arg1: memref<8x2xf32, #tpu.memory_space<vmem>>, %arg2: memref<8x128xf32, #tpu.memory_space<vmem>>, %arg3: memref<32x8xf32, #tpu.memory_space<vmem>>, %arg4: memref<32x128xf32, #tpu.memory_space<vmem>>, %arg5: memref<1x32x2xf32, #tpu.memory_space<vmem>>) attributes {dimension_semantics = [#tpu.dimension_semantics<parallel>], iteration_bounds = array<i64: 2>, scalar_prefetch = 0 : i64, scratch_operands = 0 : i64, tpu.core_type = #tpu.core_type<tc>, window_params = [{pipeline_mode = #tpu.pipeline_mode<synchronous>, transform_indices = @transform_0, window_bounds = array<i64: 8, 2>}, {transform_indices = @transform_1, window_bounds = array<i64: 8, 128>}, {pipeline_mode = #tpu.pipeline_mode<synchronous>, transform_indices = @transform_2, window_bounds = array<i64: 32, 8>}, {transform_indices = @transform_3, window_bounds = array<i64: 32, 128>}, {transform_indices = @transform_4, window_bounds = array<i64: 1, 32, 2>}]} {
    %c0 = arith.constant 0 : index
    %c0_0 = arith.constant 0 : index
    %0 = vector.load %arg2[%c0, %c0_0] : memref<8x128xf32, #tpu.memory_space<vmem>>, vector<8x128xf32>
    %c0_1 = arith.constant 0 : index
    %c0_2 = arith.constant 0 : index
    %1 = vector.load %arg1[%c0_1, %c0_2] : memref<8x2xf32, #tpu.memory_space<vmem>>, vector<8x1xf32>
    %2 = vector.broadcast %1 : vector<8x1xf32> to vector<8x128xf32>
    %3 = arith.mulf %0, %2 : vector<8x128xf32>
    %c0_3 = arith.constant 0 : index
    %c1 = arith.constant 1 : index
    %4 = vector.load %arg1[%c0_3, %c1] : memref<8x2xf32, #tpu.memory_space<vmem>>, vector<8x1xf32>
    %5 = vector.broadcast %4 : vector<8x1xf32> to vector<8x128xf32>
    %6 = arith.addf %3, %5 : vector<8x128xf32>
    %cst = arith.constant 0.000000e+00 : f32
    %7 = vector.broadcast %cst : f32 to vector<8x128xf32>
    %8 = arith.cmpf ogt, %6, %7 : vector<8x128xf32>
    %cst_4 = arith.constant 0.000000e+00 : f32
    %9 = vector.broadcast %cst_4 : f32 to vector<8x128xf32>
    %10 = arith.minimumf %6, %9 : vector<8x128xf32>
    %11 = math.exp %10 : vector<8x128xf32>
    %cst_5 = arith.constant 1.000000e+00 : f32
    %12 = vector.broadcast %cst_5 : f32 to vector<8x128xf32>
    %13 = arith.subf %11, %12 : vector<8x128xf32>
    %14 = arith.select %8, %6, %13 : vector<8x128xi1>, vector<8x128xf32>
    %c0_6 = arith.constant 0 : index
    %c0_7 = arith.constant 0 : index
    %15 = vector.load %arg3[%c0_6, %c0_7] : memref<32x8xf32, #tpu.memory_space<vmem>>, vector<32x8xf32>
    %cst_8 = arith.constant dense<0.000000e+00> : vector<32x128xf32>
    %16 = tpu.matmul %15, %14, %cst_8 {dimension_numbers = #tpu.dot_dimension_numbers<[1], [0], [0], [1], [0, 0, 1, 1], [], []>} : vector<32x8xf32>, vector<8x128xf32>, vector<32x128xf32> -> vector<32x128xf32>
    %cst_9 = arith.constant dense<0.000000e+00> : vector<32xf32>
    %17 = vector.multi_reduction <add>, %16, %cst_9 [1] : vector<32x128xf32> to vector<32xf32>
    %18 = vector.shape_cast %17 : vector<32xf32> to vector<32x1xf32>
    %c0_10 = arith.constant 0 : index
    %c0_11 = arith.constant 0 : index
    %c0_12 = arith.constant 0 : index
    %19 = vector.load %arg5[%c0_10, %c0_11, %c0_12] : memref<1x32x2xf32, #tpu.memory_space<vmem>>, vector<1x32x1xf32>
    %20 = vector.shape_cast %19 : vector<1x32x1xf32> to vector<32x1xf32>
    %21 = vector.shape_cast %18 : vector<32x1xf32> to vector<1x32x1xf32>
    tpu.vector_store %arg5[%c0_10, %c0_11, %c0_12], %21 {strides = array<i32>} : memref<1x32x2xf32, #tpu.memory_space<vmem>>, vector<1x32x1xf32>,
    %22 = arith.mulf %16, %16 : vector<32x128xf32>
    %cst_13 = arith.constant dense<0.000000e+00> : vector<32xf32>
    %23 = vector.multi_reduction <add>, %22, %cst_13 [1] : vector<32x128xf32> to vector<32xf32>
    %24 = vector.shape_cast %23 : vector<32xf32> to vector<32x1xf32>
    %c0_14 = arith.constant 0 : index
    %c0_15 = arith.constant 0 : index
    %c1_16 = arith.constant 1 : index
    %25 = vector.load %arg5[%c0_14, %c0_15, %c1_16] : memref<1x32x2xf32, #tpu.memory_space<vmem>>, vector<1x32x1xf32>
    %26 = vector.shape_cast %25 : vector<1x32x1xf32> to vector<32x1xf32>
    %27 = vector.shape_cast %24 : vector<32x1xf32> to vector<1x32x1xf32>
    tpu.vector_store %arg5[%c0_14, %c0_15, %c1_16], %27 {strides = array<i32>} : memref<1x32x2xf32, #tpu.memory_space<vmem>>, vector<1x32x1xf32>,
    %c0_17 = arith.constant 0 : index
    %c0_18 = arith.constant 0 : index
    %28 = vector.load %arg4[%c0_17, %c0_18] : memref<32x128xf32, #tpu.memory_space<vmem>>, vector<32x128xf32>
    tpu.vector_store %arg4[%c0_17, %c0_18], %16 {strides = array<i32>} : memref<32x128xf32, #tpu.memory_space<vmem>>, vector<32x128xf32>,
    return
  }
  func.func @transform_0(%arg0: i32) -> (i32, i32) {
    %c0_i32 = arith.constant 0 : i32
    %c0_i32_0 = arith.constant 0 : i32
    %c0_i32_1 = arith.constant 0 : i32
    return %c0_i32, %c0_i32_0 : i32, i32
  }
  func.func @transform_1(%arg0: i32) -> (i32, i32) {
    %c0_i32 = arith.constant 0 : i32
    %c0_i32_0 = arith.constant 0 : i32
    return %c0_i32, %arg0 : i32, i32
  }
  func.func @transform_2(%arg0: i32) -> (i32, i32) {
    %c0_i32 = arith.constant 0 : i32
    %c0_i32_0 = arith.constant 0 : i32
    %c0_i32_1 = arith.constant 0 : i32
    return %c0_i32, %c0_i32_0 : i32, i32
  }
  func.func @transform_3(%arg0: i32) -> (i32, i32) {
    %c0_i32 = arith.constant 0 : i32
    %c0_i32_0 = arith.constant 0 : i32
    return %c0_i32, %arg0 : i32, i32
  }
  func.func @transform_4(%arg0: i32) -> (i32, i32, i32) {
    %c0_i32 = arith.constant 0 : i32
    %c0_i32_0 = arith.constant 0 : i32
    %c0_i32_1 = arith.constant 0 : i32
    return %arg0, %c0_i32, %c0_i32_0 : i32, i32, i32
  }
}

module attributes {stable_mosaic.version = 11 : i64} {
  func.func @k_conv1(%arg0: i32, %arg1: memref<32x128xf32, #tpu.memory_space<vmem>>, %arg2: memref<8x32xf32, #tpu.memory_space<vmem>>, %arg3: memref<8x128xf32, #tpu.memory_space<vmem>>, %arg4: memref<1x8x2xf32, #tpu.memory_space<vmem>>) attributes {dimension_semantics = [#tpu.dimension_semantics<parallel>], iteration_bounds = array<i64: 2>, scalar_prefetch = 0 : i64, scratch_operands = 0 : i64, tpu.core_type = #tpu.core_type<tc>, window_params = [{transform_indices = @transform_0, window_bounds = array<i64: 32, 128>}, {pipeline_mode = #tpu.pipeline_mode<synchronous>, transform_indices = @transform_1, window_bounds = array<i64: 8, 32>}, {transform_indices = @transform_2, window_bounds = array<i64: 8, 128>}, {transform_indices = @transform_3, window_bounds = array<i64: 1, 8, 2>}]} {
    %c0 = arith.constant 0 : index
    %c0_0 = arith.constant 0 : index
    %0 = vector.load %arg2[%c0, %c0_0] : memref<8x32xf32, #tpu.memory_space<vmem>>, vector<8x32xf32>
    %c0_1 = arith.constant 0 : index
    %c0_2 = arith.constant 0 : index
    %1 = vector.load %arg1[%c0_1, %c0_2] : memref<32x128xf32, #tpu.memory_space<vmem>>, vector<32x128xf32>
    %cst = arith.constant dense<0.000000e+00> : vector<8x128xf32>
    %2 = tpu.matmul %0, %1, %cst {dimension_numbers = #tpu.dot_dimension_numbers<[1], [0], [0], [1], [0, 0, 1, 1], [], []>} : vector<8x32xf32>, vector<32x128xf32>, vector<8x128xf32> -> vector<8x128xf32>
    %cst_3 = arith.constant dense<0.000000e+00> : vector<8xf32>
    %3 = vector.multi_reduction <add>, %2, %cst_3 [1] : vector<8x128xf32> to vector<8xf32>
    %4 = vector.shape_cast %3 : vector<8xf32> to vector<8x1xf32>
    %c0_4 = arith.constant 0 : index
    %c0_5 = arith.constant 0 : index
    %c0_6 = arith.constant 0 : index
    %5 = vector.load %arg4[%c0_4, %c0_5, %c0_6] : memref<1x8x2xf32, #tpu.memory_space<vmem>>, vector<1x8x1xf32>
    %6 = vector.shape_cast %5 : vector<1x8x1xf32> to vector<8x1xf32>
    %7 = vector.shape_cast %4 : vector<8x1xf32> to vector<1x8x1xf32>
    tpu.vector_store %arg4[%c0_4, %c0_5, %c0_6], %7 {strides = array<i32>} : memref<1x8x2xf32, #tpu.memory_space<vmem>>, vector<1x8x1xf32>,
    %8 = arith.mulf %2, %2 : vector<8x128xf32>
    %cst_7 = arith.constant dense<0.000000e+00> : vector<8xf32>
    %9 = vector.multi_reduction <add>, %8, %cst_7 [1] : vector<8x128xf32> to vector<8xf32>
    %10 = vector.shape_cast %9 : vector<8xf32> to vector<8x1xf32>
    %c0_8 = arith.constant 0 : index
    %c0_9 = arith.constant 0 : index
    %c1 = arith.constant 1 : index
    %11 = vector.load %arg4[%c0_8, %c0_9, %c1] : memref<1x8x2xf32, #tpu.memory_space<vmem>>, vector<1x8x1xf32>
    %12 = vector.shape_cast %11 : vector<1x8x1xf32> to vector<8x1xf32>
    %13 = vector.shape_cast %10 : vector<8x1xf32> to vector<1x8x1xf32>
    tpu.vector_store %arg4[%c0_8, %c0_9, %c1], %13 {strides = array<i32>} : memref<1x8x2xf32, #tpu.memory_space<vmem>>, vector<1x8x1xf32>,
    %c0_10 = arith.constant 0 : index
    %c0_11 = arith.constant 0 : index
    %14 = vector.load %arg3[%c0_10, %c0_11] : memref<8x128xf32, #tpu.memory_space<vmem>>, vector<8x128xf32>
    tpu.vector_store %arg3[%c0_10, %c0_11], %2 {strides = array<i32>} : memref<8x128xf32, #tpu.memory_space<vmem>>, vector<8x128xf32>,
    return
  }
  func.func @transform_0(%arg0: i32) -> (i32, i32) {
    %c0_i32 = arith.constant 0 : i32
    %c0_i32_0 = arith.constant 0 : i32
    return %c0_i32, %arg0 : i32, i32
  }
  func.func @transform_1(%arg0: i32) -> (i32, i32) {
    %c0_i32 = arith.constant 0 : i32
    %c0_i32_0 = arith.constant 0 : i32
    %c0_i32_1 = arith.constant 0 : i32
    return %c0_i32, %c0_i32_0 : i32, i32
  }
  func.func @transform_2(%arg0: i32) -> (i32, i32) {
    %c0_i32 = arith.constant 0 : i32
    %c0_i32_0 = arith.constant 0 : i32
    return %c0_i32, %arg0 : i32, i32
  }
  func.func @transform_3(%arg0: i32) -> (i32, i32, i32) {
    %c0_i32 = arith.constant 0 : i32
    %c0_i32_0 = arith.constant 0 : i32
    %c0_i32_1 = arith.constant 0 : i32
    return %arg0, %c0_i32, %c0_i32_0 : i32, i32, i32
  }
}

module attributes {stable_mosaic.version = 11 : i64} {
  func.func @k_conv2(%arg0: i32, %arg1: memref<8x2xf32, #tpu.memory_space<vmem>>, %arg2: memref<2x128xf32, #tpu.memory_space<vmem>>, %arg3: memref<8x128xf32, #tpu.memory_space<vmem>>, %arg4: memref<8x24xf32, #tpu.memory_space<vmem>>, %arg5: memref<8x128xf32, #tpu.memory_space<vmem>>, %arg6: memref<1x8x2xf32, #tpu.memory_space<vmem>>) attributes {dimension_semantics = [#tpu.dimension_semantics<parallel>], iteration_bounds = array<i64: 2>, scalar_prefetch = 0 : i64, scratch_operands = 0 : i64, tpu.core_type = #tpu.core_type<tc>, window_params = [{pipeline_mode = #tpu.pipeline_mode<synchronous>, transform_indices = @transform_0, window_bounds = array<i64: 8, 2>}, {pipeline_mode = #tpu.pipeline_mode<synchronous>, transform_indices = @transform_1, window_bounds = array<i64: 2, 128>}, {transform_indices = @transform_2, window_bounds = array<i64: 8, 128>}, {pipeline_mode = #tpu.pipeline_mode<synchronous>, transform_indices = @transform_3, window_bounds = array<i64: 8, 24>}, {transform_indices = @transform_4, window_bounds = array<i64: 8, 128>}, {transform_indices = @transform_5, window_bounds = array<i64: 1, 8, 2>}]} {
    %c0 = arith.constant 0 : index
    %c0_0 = arith.constant 0 : index
    %0 = vector.load %arg3[%c0, %c0_0] : memref<8x128xf32, #tpu.memory_space<vmem>>, vector<8x128xf32>
    %c0_1 = arith.constant 0 : index
    %c0_2 = arith.constant 0 : index
    %1 = vector.load %arg1[%c0_1, %c0_2] : memref<8x2xf32, #tpu.memory_space<vmem>>, vector<8x1xf32>
    %2 = vector.broadcast %1 : vector<8x1xf32> to vector<8x128xf32>
    %3 = arith.mulf %0, %2 : vector<8x128xf32>
    %c0_3 = arith.constant 0 : index
    %c1 = arith.constant 1 : index
    %4 = vector.load %arg1[%c0_3, %c1] : memref<8x2xf32, #tpu.memory_space<vmem>>, vector<8x1xf32>
    %5 = vector.broadcast %4 : vector<8x1xf32> to vector<8x128xf32>
    %6 = arith.addf %3, %5 : vector<8x128xf32>
    %cst = arith.constant 0.000000e+00 : f32
    %7 = vector.broadcast %cst : f32 to vector<8x128xf32>
    %8 = arith.cmpf ogt, %6, %7 : vector<8x128xf32>
    %cst_4 = arith.constant 0.000000e+00 : f32
    %9 = vector.broadcast %cst_4 : f32 to vector<8x128xf32>
    %10 = arith.minimumf %6, %9 : vector<8x128xf32>
    %11 = math.exp %10 : vector<8x128xf32>
    %cst_5 = arith.constant 1.000000e+00 : f32
    %12 = vector.broadcast %cst_5 : f32 to vector<8x128xf32>
    %13 = arith.subf %11, %12 : vector<8x128xf32>
    %14 = arith.select %8, %6, %13 : vector<8x128xi1>, vector<8x128xf32>
    %c1_i32 = arith.constant 1 : i32
    %15 = tpu.dynamic_rotate %14 by %c1_i32 dim 1 : vector<8x128xf32>, i32 -> vector<8x128xf32>
    %c0_6 = arith.constant 0 : index
    %c0_7 = arith.constant 0 : index
    %16 = vector.load %arg2[%c0_6, %c0_7] : memref<2x128xf32, #tpu.memory_space<vmem>>, vector<1x128xf32>
    %17 = vector.broadcast %16 : vector<1x128xf32> to vector<8x128xf32>
    %18 = arith.mulf %15, %17 : vector<8x128xf32>
    %c127_i32 = arith.constant 127 : i32
    %19 = tpu.dynamic_rotate %14 by %c127_i32 dim 1 : vector<8x128xf32>, i32 -> vector<8x128xf32>
    %c1_8 = arith.constant 1 : index
    %c0_9 = arith.constant 0 : index
    %20 = vector.load %arg2[%c1_8, %c0_9] : memref<2x128xf32, #tpu.memory_space<vmem>>, vector<1x128xf32>
    %21 = vector.broadcast %20 : vector<1x128xf32> to vector<8x128xf32>
    %22 = arith.mulf %19, %21 : vector<8x128xf32>
    %23 = tpu.concatenate %18, %14, %22 in 0 : vector<8x128xf32>, vector<8x128xf32>, vector<8x128xf32> -> vector<24x128xf32>
    %c0_10 = arith.constant 0 : index
    %c0_11 = arith.constant 0 : index
    %24 = vector.load %arg4[%c0_10, %c0_11] : memref<8x24xf32, #tpu.memory_space<vmem>>, vector<8x24xf32>
    %cst_12 = arith.constant dense<0.000000e+00> : vector<8x128xf32>
    %25 = tpu.matmul %24, %23, %cst_12 {dimension_numbers = #tpu.dot_dimension_numbers<[1], [0], [0], [1], [0, 0, 1, 1], [], []>} : vector<8x24xf32>, vector<24x128xf32>, vector<8x128xf32> -> vector<8x128xf32>
    %cst_13 = arith.constant dense<0.000000e+00> : vector<8xf32>
    %26 = vector.multi_reduction <add>, %25, %cst_13 [1] : vector<8x128xf32> to vector<8xf32>
    %27 = vector.shape_cast %26 : vector<8xf32> to vector<8x1xf32>
    %c0_14 = arith.constant 0 : index
    %c0_15 = arith.constant 0 : index
    %c0_16 = arith.constant 0 : index
    %28 = vector.load %arg6[%c0_14, %c0_15, %c0_16] : memref<1x8x2xf32, #tpu.memory_space<vmem>>, vector<1x8x1xf32>
    %29 = vector.shape_cast %28 : vector<1x8x1xf32> to vector<8x1xf32>
    %30 = vector.shape_cast %27 : vector<8x1xf32> to vector<1x8x1xf32>
    tpu.vector_store %arg6[%c0_14, %c0_15, %c0_16], %30 {strides = array<i32>} : memref<1x8x2xf32, #tpu.memory_space<vmem>>, vector<1x8x1xf32>,
    %31 = arith.mulf %25, %25 : vector<8x128xf32>
    %cst_17 = arith.constant dense<0.000000e+00> : vector<8xf32>
    %32 = vector.multi_reduction <add>, %31, %cst_17 [1] : vector<8x128xf32> to vector<8xf32>
    %33 = vector.shape_cast %32 : vector<8xf32> to vector<8x1xf32>
    %c0_18 = arith.constant 0 : index
    %c0_19 = arith.constant 0 : index
    %c1_20 = arith.constant 1 : index
    %34 = vector.load %arg6[%c0_18, %c0_19, %c1_20] : memref<1x8x2xf32, #tpu.memory_space<vmem>>, vector<1x8x1xf32>
    %35 = vector.shape_cast %34 : vector<1x8x1xf32> to vector<8x1xf32>
    %36 = vector.shape_cast %33 : vector<8x1xf32> to vector<1x8x1xf32>
    tpu.vector_store %arg6[%c0_18, %c0_19, %c1_20], %36 {strides = array<i32>} : memref<1x8x2xf32, #tpu.memory_space<vmem>>, vector<1x8x1xf32>,
    %c0_21 = arith.constant 0 : index
    %c0_22 = arith.constant 0 : index
    %37 = vector.load %arg5[%c0_21, %c0_22] : memref<8x128xf32, #tpu.memory_space<vmem>>, vector<8x128xf32>
    tpu.vector_store %arg5[%c0_21, %c0_22], %25 {strides = array<i32>} : memref<8x128xf32, #tpu.memory_space<vmem>>, vector<8x128xf32>,
    return
  }
  func.func @transform_0(%arg0: i32) -> (i32, i32) {
    %c0_i32 = arith.constant 0 : i32
    %c0_i32_0 = arith.constant 0 : i32
    %c0_i32_1 = arith.constant 0 : i32
    return %c0_i32, %c0_i32_0 : i32, i32
  }
  func.func @transform_1(%arg0: i32) -> (i32, i32) {
    %c0_i32 = arith.constant 0 : i32
    %c0_i32_0 = arith.constant 0 : i32
    %c0_i32_1 = arith.constant 0 : i32
    return %c0_i32, %c0_i32_0 : i32, i32
  }
  func.func @transform_2(%arg0: i32) -> (i32, i32) {
    %c0_i32 = arith.constant 0 : i32
    %c0_i32_0 = arith.constant 0 : i32
    return %c0_i32, %arg0 : i32, i32
  }
  func.func @transform_3(%arg0: i32) -> (i32, i32) {
    %c0_i32 = arith.constant 0 : i32
    %c0_i32_0 = arith.constant 0 : i32
    %c0_i32_1 = arith.constant 0 : i32
    return %c0_i32, %c0_i32_0 : i32, i32
  }
  func.func @transform_4(%arg0: i32) -> (i32, i32) {
    %c0_i32 = arith.constant 0 : i32
    %c0_i32_0 = arith.constant 0 : i32
    return %c0_i32, %arg0 : i32, i32
  }
  func.func @transform_5(%arg0: i32) -> (i32, i32, i32) {
    %c0_i32 = arith.constant 0 : i32
    %c0_i32_0 = arith.constant 0 : i32
    %c0_i32_1 = arith.constant 0 : i32
    return %arg0, %c0_i32, %c0_i32_0 : i32, i32, i32
  }
}

module attributes {stable_mosaic.version = 11 : i64} {
  func.func @k_out(%arg0: i32, %arg1: memref<32x2xf32, #tpu.memory_space<vmem>>, %arg2: memref<32x128xf32, #tpu.memory_space<vmem>>, %arg3: memref<32x128xf32, #tpu.memory_space<vmem>>, %arg4: memref<32x128xf32, #tpu.memory_space<vmem>>) attributes {dimension_semantics = [#tpu.dimension_semantics<parallel>], iteration_bounds = array<i64: 2>, scalar_prefetch = 0 : i64, scratch_operands = 0 : i64, tpu.core_type = #tpu.core_type<tc>, window_params = [{pipeline_mode = #tpu.pipeline_mode<synchronous>, transform_indices = @transform_0, window_bounds = array<i64: 32, 2>}, {transform_indices = @transform_1, window_bounds = array<i64: 32, 128>}, {transform_indices = @transform_2, window_bounds = array<i64: 32, 128>}, {transform_indices = @transform_3, window_bounds = array<i64: 32, 128>}]} {
    %c0 = arith.constant 0 : index
    %c0_0 = arith.constant 0 : index
    %0 = vector.load %arg2[%c0, %c0_0] : memref<32x128xf32, #tpu.memory_space<vmem>>, vector<32x128xf32>
    %c0_1 = arith.constant 0 : index
    %c0_2 = arith.constant 0 : index
    %1 = vector.load %arg1[%c0_1, %c0_2] : memref<32x2xf32, #tpu.memory_space<vmem>>, vector<32x1xf32>
    %2 = vector.broadcast %1 : vector<32x1xf32> to vector<32x128xf32>
    %3 = arith.mulf %0, %2 : vector<32x128xf32>
    %c0_3 = arith.constant 0 : index
    %c1 = arith.constant 1 : index
    %4 = vector.load %arg1[%c0_3, %c1] : memref<32x2xf32, #tpu.memory_space<vmem>>, vector<32x1xf32>
    %5 = vector.broadcast %4 : vector<32x1xf32> to vector<32x128xf32>
    %6 = arith.addf %3, %5 : vector<32x128xf32>
    %c0_4 = arith.constant 0 : index
    %c0_5 = arith.constant 0 : index
    %7 = vector.load %arg3[%c0_4, %c0_5] : memref<32x128xf32, #tpu.memory_space<vmem>>, vector<32x128xf32>
    %8 = arith.addf %6, %7 : vector<32x128xf32>
    %cst = arith.constant 0.000000e+00 : f32
    %9 = vector.broadcast %cst : f32 to vector<32x128xf32>
    %10 = arith.cmpf ogt, %8, %9 : vector<32x128xf32>
    %cst_6 = arith.constant 0.000000e+00 : f32
    %11 = vector.broadcast %cst_6 : f32 to vector<32x128xf32>
    %12 = arith.minimumf %8, %11 : vector<32x128xf32>
    %13 = math.exp %12 : vector<32x128xf32>
    %cst_7 = arith.constant 1.000000e+00 : f32
    %14 = vector.broadcast %cst_7 : f32 to vector<32x128xf32>
    %15 = arith.subf %13, %14 : vector<32x128xf32>
    %16 = arith.select %10, %8, %15 : vector<32x128xi1>, vector<32x128xf32>
    %c0_8 = arith.constant 0 : index
    %c0_9 = arith.constant 0 : index
    %17 = vector.load %arg4[%c0_8, %c0_9] : memref<32x128xf32, #tpu.memory_space<vmem>>, vector<32x128xf32>
    tpu.vector_store %arg4[%c0_8, %c0_9], %16 {strides = array<i32>} : memref<32x128xf32, #tpu.memory_space<vmem>>, vector<32x128xf32>,
    return
  }
  func.func @transform_0(%arg0: i32) -> (i32, i32) {
    %c0_i32 = arith.constant 0 : i32
    %c0_i32_0 = arith.constant 0 : i32
    %c0_i32_1 = arith.constant 0 : i32
    return %c0_i32, %c0_i32_0 : i32, i32
  }
  func.func @transform_1(%arg0: i32) -> (i32, i32) {
    %c0_i32 = arith.constant 0 : i32
    %c0_i32_0 = arith.constant 0 : i32
    return %c0_i32, %arg0 : i32, i32
  }
  func.func @transform_2(%arg0: i32) -> (i32, i32) {
    %c0_i32 = arith.constant 0 : i32
    %c0_i32_0 = arith.constant 0 : i32
    return %c0_i32, %arg0 : i32, i32
  }
  func.func @transform_3(%arg0: i32) -> (i32, i32) {
    %c0_i32 = arith.constant 0 : i32
    %c0_i32_0 = arith.constant 0 : i32
    return %c0_i32, %arg0 : i32, i32
  }
}

</mosaic_0001>

<llo_original>
// kernel: tile.9
$region0: #{tile.9}
  %s0 = inlined_call_operand.vmem [shape: f32[2,8,16], index: 0, kind: input, shape index: {}]
  %s1 = inlined_call_operand.vmem [shape: f32[2,128], index: 1, kind: output, shape index: {}]
  $region1: #{tile.9} parent=0
    #allocation0 [shape = 'u8[4096]{0}', space=vmem, size = 0x1000, scoped, tag = 'scoped mem for output reshape']
    %s2 = smov 3
    %v3 = vld [vmem:[%s0] ss:$8 sm:%s2]
    %vm4 = vcmask 130048
    %5 = vst.msk [vmem:[#allocation0] sm:$0x3] %vm4, %v3
    %s6 = scalar_lea.vmem %s0, 7
    %s7 = smov 3
    %v8 = vld [vmem:[%s6] ss:$8 sm:%s7]
    %9 = vrot.lane.b32.xlu0 %v8, 112
    %v10 = vpop.permute.xlu0 %9
    %vm11 = vcmask 1048448
    %12 = vst.msk [vmem:[#allocation0] sm:$0x3] %vm11, %v10
    %s13 = scalar_lea.vmem %s0, 6
    %s14 = smov 3
    %v15 = vld [vmem:[%s13] ss:$8 sm:%s14]
    %16 = vrot.lane.b32.xlu0 %v15, 96
    %v17 = vpop.permute.xlu0 %16
    %vm18 = vcmask 917248
    %19 = vst.msk [vmem:[#allocation0] sm:$0x3] %vm18, %v17
    %s20 = scalar_lea.vmem %s0, 5
    %s21 = smov 3
    %v22 = vld [vmem:[%s20] ss:$8 sm:%s21]
    %23 = vrot.lane.b32.xlu0 %v22, 80
    %v24 = vpop.permute.xlu0 %23
    %vm25 = vcmask 786048
    %26 = vst.msk [vmem:[#allocation0] sm:$0x3] %vm25, %v24
    %s27 = scalar_lea.vmem %s0, 4
    %s28 = smov 3
    %v29 = vld [vmem:[%s27] ss:$8 sm:%s28]
    %30 = vrot.lane.b32.xlu0 %v29, 64
    %v31 = vpop.permute.xlu0 %30
    %vm32 = vcmask 654848
    %33 = vst.msk [vmem:[#allocation0] sm:$0x3] %vm32, %v31
    %s34 = scalar_lea.vmem %s0, 3
    %s35 = smov 3
    %v36 = vld [vmem:[%s34] ss:$8 sm:%s35]
    %37 = vrot.lane.b32.xlu0 %v36, 48
    %v38 = vpop.permute.xlu0 %37
    %vm39 = vcmask 523648
    %40 = vst.msk [vmem:[#allocation0] sm:$0x3] %vm39, %v38
    %s41 = scalar_lea.vmem %s0, 2
    %s42 = smov 3
    %v43 = vld [vmem:[%s41] ss:$8 sm:%s42]
    %44 = vrot.lane.b32.xlu0 %v43, 32
    %v45 = vpop.permute.xlu0 %44
    %vm46 = vcmask 392448
    %47 = vst.msk [vmem:[#allocation0] sm:$0x3] %vm46, %v45
    %s48 = scalar_lea.vmem %s0, 1
    %s49 = smov 3
    %v50 = vld [vmem:[%s48] ss:$8 sm:%s49]
    %51 = vrot.lane.b32.xlu0 %v50, 16
    %v52 = vpop.permute.xlu0 %51
    %vm53 = vcmask 261248
    %54 = vst.msk [vmem:[#allocation0] sm:$0x3] %vm53, %v52
    %s56 = sshllo.u32 0, 2
    %v58 = vld [vmem:[#allocation0] sm:%s56]
    %s59 = sshllo.u32 0, 2
    %60 = vst [vmem:[%s1] sm:%s59] %v58

// kernel: decoder_bottleneck_forward.4
$region0: #{decoder_bottleneck_forward.4}
  #allocation0 [shape = 'u32[]', space=smem, size = 0x4, offset = 0x4, fixed_abs, tag = 'smem constant byte address 0x4 - core index']
  #allocation1 [shape = 'u32[144,128]{1,0:T(1,128)}', space=vmem, size = 0x12000, scoped, tag = 'internal scratch']
  %s0 = inlined_call_operand.vmem [shape: f32[32,256], index: 0, kind: input, shape index: {}]
  %s1 = inlined_call_operand.vmem [shape: f32[8,32], index: 1, kind: input, shape index: {}]
  %s2 = inlined_call_operand.vmem [shape: f32[8,256], index: 2, kind: output, shape index: {0}]
  %s3 = inlined_call_operand.vmem [shape: f32[2,8,2], index: 3, kind: output, shape index: {1}]
  %4 = xla_tuple %s2, %s3
  %s5 = sld [smem:[#allocation0]]
  $region87: #{decoder_bottleneck_forward.4} parent=0
    _
  %s7 = ssub.s32 1, %s5
  %s8 = scalar_select 0, %s7, %s5
  $region1: #{decoder_bottleneck_forward.4} parent=0
    #allocation2 [shape = 'u8[32768]{0}', space=vmem, size = 0x8000, scoped, tag = 'input window, operand 0']
    loop: start=0, step=1, limit=4
    $region2: #{decoder_bottleneck_forward.4} parent=1 // loop_pre_header
      _
    $region3: #{decoder_bottleneck_forward.4} parent=1 // loop_header
      %s10 = sphi 0, %s14
      %p11 = scmp.ge.s32.totalorder %s10, 4
      %s20 = sphi 0, %s22
      %s23 = sphi 0, %s20
      %s24 = sphi 0, %s23
      %s40 = sphi 0, %s24
      %s44 = sphi 0, %s44
      %s46 = sphi 0, %s44
      %s47 = sphi 0, %s46
      %s61 = sphi 0, %s47
      %s67 = sphi 0, %s69
      %s70 = sphi 0, %s67
      %s71 = sphi 0, %s70
      %s87 = sphi 0, %s71
      %s93 = sphi 0, %s95
      %s96 = sphi 0, %s93
      %s97 = sphi 0, %s96
      %s113 = sphi 0, %s97
    $region4: #{decoder_bottleneck_forward.4} parent=1 // loop_header_branch
      %13 = sbr.rel (%p11) target = $region8
    $region5: #{decoder_bottleneck_forward.4} parent=1 // loop_body
      %s15 = ssub.s32 %s10, 1
      %s16 = ssub.s32 %s10, 2
      %s17 = sadd.s32 %s10, 1
      %s18 = ssub.s32 %s10, %s17
      %p19 = scmp.eq.s32.totalorder %s18, 0
      %s21 = sadd.s32 %s20, 1
      %s22 = scalar_select %p19, %s20, %s21
      %p25 = pneg %p19
      %p26 = scmp.eq.s32.totalorder %s10, 1
      %p27 = por %p25, %p26
      %p28 = scmp.ne.s32.totalorder %s20, %s23
      %p29 = scmp.eq.s32.totalorder %s10, 0
      %p30 = por %p28, %p29
      %p31 = scmp.ne.s32.totalorder %s20, %s23
      %p32 = scmp.eq.s32.totalorder %s15, 1
      %p33 = por %p31, %p32
      %p34 = scmp.ne.s32.totalorder %s23, %s24
      %p35 = scmp.eq.s32.totalorder %s15, 0
      %p36 = por %p34, %p35
      %p37 = scmp.ne.s32.totalorder %s23, %s24
      %p38 = scmp.eq.s32.totalorder %s16, 1
      %p39 = por %p37, %p38
      %p41 = scmp.ne.s32.totalorder %s24, %s40
      %p42 = scmp.eq.s32.totalorder %s16, 0
      %p43 = por %p41, %p42
      %s45 = sadd.s32 %s44, 1
      %p48 = scmp.eq.s32.totalorder %s10, 1
      %p49 = scmp.ne.s32.totalorder %s44, %s46
      %p50 = scmp.eq.s32.totalorder %s10, 0
      %p51 = por %p49, %p50
      %p52 = scmp.ne.s32.totalorder %s44, %s46
      %p53 = scmp.eq.s32.totalorder %s15, 1
      %p54 = por %p52, %p53
      %p55 = scmp.ne.s32.totalorder %s46, %s47
      %p56 = scmp.eq.s32.totalorder %s15, 0
      %p57 = por %p55, %p56
      %p58 = scmp.ne.s32.totalorder %s46, %s47
      %p59 = scmp.eq.s32.totalorder %s16, 1
      %p60 = por %p58, %p59
      %p62 = scmp.ne.s32.totalorder %s47, %s61
      %p63 = scmp.eq.s32.totalorder %s16, 0
      %p64 = por %p62, %p63
      %s65 = ssub.s32 %s10, %s17
      %p66 = scmp.eq.s32.totalorder %s65, 0
      %s68 = sadd.s32 %s67, 1
      %s69 = scalar_select %p66, %s67, %s68
      %p72 = pneg %p66
      %p73 = scmp.eq.s32.totalorder %s10, 1
      %p74 = por %p72, %p73
      %p75 = scmp.ne.s32.totalorder %s67, %s70
      %p76 = scmp.eq.s32.totalorder %s10, 0
      %p77 = por %p75, %p76
      %p78 = scmp.ne.s32.totalorder %s67, %s70
      %p79 = scmp.eq.s32.totalorder %s15, 1
      %p80 = por %p78, %p79
      %p81 = scmp.ne.s32.totalorder %s70, %s71
      %p82 = scmp.eq.s32.totalorder %s15, 0
      %p83 = por %p81, %p82
      %p84 = scmp.ne.s32.totalorder %s70, %s71
      %p85 = scmp.eq.s32.totalorder %s16, 1
      %p86 = por %p84, %p85
      %p88 = scmp.ne.s32.totalorder %s71, %s87
      %p89 = scmp.eq.s32.totalorder %s16, 0
      %p90 = por %p88, %p89
      %s91 = ssub.s32 %s10, %s17
      %p92 = scmp.eq.s32.totalorder %s91, 0
      %s94 = sadd.s32 %s93, 1
      %s95 = scalar_select %p92, %s93, %s94
      %p98 = pneg %p92
      %p99 = scmp.eq.s32.totalorder %s10, 1
      %p100 = por %p98, %p99
      %p101 = scmp.ne.s32.totalorder %s93, %s96
      %p102 = scmp.eq.s32.totalorder %s10, 0
      %p103 = por %p101, %p102
      %p104 = scmp.ne.s32.totalorder %s93, %s96
      %p105 = scmp.eq.s32.totalorder %s15, 1
      %p106 = por %p104, %p105
      %p107 = scmp.ne.s32.totalorder %s96, %s97
      %p108 = scmp.eq.s32.totalorder %s15, 0
      %p109 = por %p107, %p108
      %p110 = scmp.ne.s32.totalorder %s96, %s97
      %p111 = scmp.eq.s32.totalorder %s16, 1
      %p112 = por %p110, %p111
      %p114 = scmp.ne.s32.totalorder %s97, %s113
      %p115 = scmp.eq.s32.totalorder %s16, 0
      %p116 = por %p114, %p115
      %p117 = scmp.le.s32.totalorder 1, %s10
      %p118 = scmp.lt.s32.totalorder %s10, 3
      %p119 = pnand %p117, %p118
      %p120 = pneg %p119
      // Predicated region
      $region9: #{decoder_bottleneck_forward.4} parent=5 // pred_check
        _
      $region10: #{decoder_bottleneck_forward.4} parent=5 // pred_check_branch
        %122 = sbr.rel (%p119) target = $region12
      $region11: #{decoder_bottleneck_forward.4} parent=5 // pred_region
        %s123 = ssub.s32 %s10, 1
        // Predicated region
        $region13: #{decoder_bottleneck_forward.4} parent=11 // pred_check
          %p124 = pneg %p57
        $region14: #{decoder_bottleneck_forward.4} parent=11 // pred_check_branch
          %126 = sbr.rel (%p124) target = $region16
        $region15: #{decoder_bottleneck_forward.4} parent=11 // pred_region
          _
        $region16: #{decoder_bottleneck_forward.4} parent=11 // pred_fallthru
          _
      $region12: #{decoder_bottleneck_forward.4} parent=5 // pred_fallthru
        _
      %p127 = scmp.lt.s32.totalorder %s10, 2
      // Predicated region
      $region17: #{decoder_bottleneck_forward.4} parent=5 // pred_check
        %p128 = pneg %p127
      $region18: #{decoder_bottleneck_forward.4} parent=5 // pred_check_branch
        %130 = sbr.rel (%p128) target = $region20
      $region19: #{decoder_bottleneck_forward.4} parent=5 // pred_region
        // Predicated region
        $region21: #{decoder_bottleneck_forward.4} parent=19 // pred_check
          %p131 = pneg %p30
        $region22: #{decoder_bottleneck_forward.4} parent=19 // pred_check_branch
          %133 = sbr.rel (%p131) target = $region24
        $region23: #{decoder_bottleneck_forward.4} parent=19 // pred_region
          %s134 = sand.u32 %s20, 1
          %s135 = sand.u32 %s20, 1
          %s136 = smul.addr %s135, 32
          %s137 = scalar_lea.vmem [#allocation2], %s136
          %s138 = smul.addr %s10, 8
          %s139 = scalar_lea.vmem %s0, %s138
          // Predicated region
          $region25: #{decoder_bottleneck_forward.4} parent=23 // pred_check
            _
          $region26: #{decoder_bottleneck_forward.4} parent=23 // pred_check_branch
            %141 = sbr.rel (0) target = $region28
          $region27: #{decoder_bottleneck_forward.4} parent=23 // pred_region
            // Predicated region
            $region29: #{decoder_bottleneck_forward.4} parent=27 // pred_check
              _
            $region30: #{decoder_bottleneck_forward.4} parent=27 // pred_check_branch
              %143 = sbr.rel (0) target = $region32
            $region31: #{decoder_bottleneck_forward.4} parent=27 // pred_region
              // Predicated region
              $region44: #{decoder_bottleneck_forward.4} parent=31 // pred_check
                _
              $region45: #{decoder_bottleneck_forward.4} parent=31 // pred_check_branch
                %164 = sbr.rel (0) target = $region47
              $region46: #{decoder_bottleneck_forward.4} parent=31 // pred_region
                loop: start=0, step=1, limit=1
                $region48: #{decoder_bottleneck_forward.4} parent=46 // loop_pre_header
                  _
                $region49: #{decoder_bottleneck_forward.4} parent=46 // loop_header
                  %s166 = sphi 0, %s170
                  %p167 = scmp.ge.s32.totalorder %s166, 1
                  %s171 = sphi %s139, %s139
                  %s172 = sphi %s137, %s137
                $region50: #{decoder_bottleneck_forward.4} parent=46 // loop_header_branch
                  %169 = sbr.rel (%p167) target = $region54
                $region51: #{decoder_bottleneck_forward.4} parent=46 // loop_body
                  %v173 = vld [vmem:[%s171] sm:$0xff]
                  %174 = vst [vmem:[%s172] sm:$0xff] %v173
                  %v175 = vld [vmem:[%s171 + $0x10] sm:$0xff]
                  %176 = vst [vmem:[%s172 + $0x8] sm:$0xff] %v175
                  %v177 = vld [vmem:[%s171 + $0x20] sm:$0xff]
                  %178 = vst [vmem:[%s172 + $0x10] sm:$0xff] %v177
                  %v179 = vld [vmem:[%s171 + $0x30] sm:$0xff]
                  %180 = vst [vmem:[%s172 + $0x18] sm:$0xff] %v179
                $region52: #{decoder_bottleneck_forward.4} parent=46 // loop_footer
                  %s170 = sadd.s32 1, %s166
                $region53: #{decoder_bottleneck_forward.4} parent=46 // loop_footer_branch
                  %165 = sbr.rel target = $region49
                $region54: #{decoder_bottleneck_forward.4} parent=46 // loop_exit
                  _
              $region47: #{decoder_bottleneck_forward.4} parent=31 // pred_fallthru
                _
              // Predicated region
              $region55: #{decoder_bottleneck_forward.4} parent=31 // pred_check
                _
              $region56: #{decoder_bottleneck_forward.4} parent=31 // pred_check_branch
                %182 = sbr.rel target = $region58
              $region57: #{decoder_bottleneck_forward.4} parent=31 // pred_region
                _
              $region58: #{decoder_bottleneck_forward.4} parent=31 // pred_fallthru
                _
            $region32: #{decoder_bottleneck_forward.4} parent=27 // pred_fallthru
              _
            // Predicated region
            $region33: #{decoder_bottleneck_forward.4} parent=27 // pred_check
              _
            $region34: #{decoder_bottleneck_forward.4} parent=27 // pred_check_branch
              %145 = sbr.rel target = $region36
            $region35: #{decoder_bottleneck_forward.4} parent=27 // pred_region
              loop: start=0, step=1, limit=1
              $region37: #{decoder_bottleneck_forward.4} parent=35 // loop_pre_header
                _
              $region38: #{decoder_bottleneck_forward.4} parent=35 // loop_header
                %s148 = sphi 0, %s152
                %p149 = scmp.ge.s32.totalorder %s148, 1
                %s153 = sphi %s139, %s139
                %s154 = sphi %s137, %s137
              $region39: #{decoder_bottleneck_forward.4} parent=35 // loop_header_branch
                %151 = sbr.rel (%p149) target = $region43
              $region40: #{decoder_bottleneck_forward.4} parent=35 // loop_body
                %v155 = vld [vmem:[%s153] sm:$0xff]
                %156 = vst [vmem:[%s154] sm:$0xff] %v155
                %v157 = vld [vmem:[%s153 + $0x10] sm:$0xff]
                %158 = vst [vmem:[%s154 + $0x8] sm:$0xff] %v157
                %v159 = vld [vmem:[%s153 + $0x20] sm:$0xff]
                %160 = vst [vmem:[%s154 + $0x10] sm:$0xff] %v159
                %v161 = vld [vmem:[%s153 + $0x30] sm:$0xff]
                %162 = vst [vmem:[%s154 + $0x18] sm:$0xff] %v161
              $region41: #{decoder_bottleneck_forward.4} parent=35 // loop_footer
                %s152 = sadd.s32 1, %s148
              $region42: #{decoder_bottleneck_forward.4} parent=35 // loop_footer_branch
                %147 = sbr.rel target = $region38
              $region43: #{decoder_bottleneck_forward.4} parent=35 // loop_exit
                _
            $region36: #{decoder_bottleneck_forward.4} parent=27 // pred_fallthru
              _
          $region28: #{decoder_bottleneck_forward.4} parent=23 // pred_fallthru
            _
          %183 = vnop
        $region24: #{decoder_bottleneck_forward.4} parent=19 // pred_fallthru
          _
      $region20: #{decoder_bottleneck_forward.4} parent=5 // pred_fallthru
        _
      %p184 = scmp.le.s32.totalorder 1, %s10
      %p185 = scmp.lt.s32.totalorder %s10, 3
      %p186 = pnand %p184, %p185
      %p187 = pneg %p186
      // Predicated region
      $region59: #{decoder_bottleneck_forward.4} parent=5 // pred_check
        _
      $region60: #{decoder_bottleneck_forward.4} parent=5 // pred_check_branch
        %189 = sbr.rel (%p186) target = $region62
      $region61: #{decoder_bottleneck_forward.4} parent=5 // pred_region
        %s190 = ssub.s32 %s10, 1
        %s191 = sand.u32 %s23, 1
        %s192 = sand.u32 %s23, 1
        %s193 = smul.addr %s192, 32
        %s194 = scalar_lea.vmem [#allocation2], %s193
        // Predicated region
        $region63: #{decoder_bottleneck_forward.4} parent=61 // pred_check
          %p195 = pneg %p36
        $region64: #{decoder_bottleneck_forward.4} parent=61 // pred_check_branch
          %197 = sbr.rel (%p195) target = $region66
        $region65: #{decoder_bottleneck_forward.4} parent=61 // pred_region
          _
        $region66: #{decoder_bottleneck_forward.4} parent=61 // pred_fallthru
          _
        %s198 = sand.u32 %s23, 1
        %s199 = sand.u32 %s23, 1
        %s200 = smul.addr %s199, 32
        %s201 = scalar_lea.vmem [#allocation2], %s200
        %p202 = pneg %p36
        %p203 = pneg %p33
        %p204 = pneg %p57
        %p205 = pneg %p54
        %p206 = pneg %p83
        %p207 = pneg %p80
        %p208 = scmp.lt.s32.totalorder %s15, 1
        %s209 = scalar_select %p208, %s15, 1
        %s210 = smul.addr %s209, 8
        %s211 = scalar_lea.vmem %s2, %s210
        %p212 = pneg %p109
        %p213 = pneg %p106
        %p214 = scmp.lt.s32.totalorder %s15, 1
        %s215 = scalar_select %p214, %s15, 1
        %s216 = smul.addr %s215, 8
        %s217 = scalar_lea.vmem %s3, %s216
        %p218 = scmp.lt.s32.totalorder %s15, 1
        %s219 = scalar_select %p218, %s15, 1
        %s220 = smul.addr %s219, 8
        %s221 = scalar_lea.vmem %s2, %s220
        %p222 = scmp.lt.s32.totalorder %s15, 1
        %s223 = scalar_select %p222, %s15, 1
        %s224 = smul.addr %s223, 8
        %s225 = scalar_lea.vmem %s3, %s224
        %v226 = vld [vmem:[%s1] sm:$0xff]
        %v227 = vld [vmem:[%s194] sm:$0xff]
        %v228 = vld [vmem:[%s194 + $0x8] sm:$0xff]
        %v229 = vld [vmem:[%s194 + $0x10] sm:$0xff]
        %v230 = vld [vmem:[%s194 + $0x18] sm:$0xff]
        %vm231 = vcmask 261120
        %v233 = vsel %vm231, %v226, 0
        %235 = vmatprep.subr.mxu0 0.0
        %236 = vmatpush1.msra.mxu0 %v227
        %237 = vmatprep.subr.mxu0 0.0
        %238 = vmatpush1.msra.mxu0 %v228
        %239 = vmatprep.subr.mxu0 0.0
        %240 = vmatpush1.msra.mxu0 %v229
        %241 = vmatprep.subr.mxu0 0.0
        %242 = vmatpush1.msra.mxu0 %v230
        %243 = vmatprep.subr.mxu0 0.0
        %244 = vmatpush1.msra.mxu0 0.0
        %245 = vmatprep.subr.mxu0 0.0
        %246 = vmatpush1.msra.mxu0 0.0
        %247 = vmatprep.subr.mxu0 0.0
        %248 = vmatpush1.msra.mxu0 0.0
        %249 = vmatprep.subr.mxu0 0.0
        %250 = vmatpush1.msra.mxu0 0.0
        %251 = vmatprep.subr.mxu0 0.0
        %252 = vmatpush1.msra.mxu0 0.0
        %253 = vmatprep.subr.mxu0 0.0
        %254 = vmatpush1.msra.mxu0 0.0
        %255 = vmatprep.subr.mxu0 0.0
        %256 = vmatpush1.msra.mxu0 0.0
        %257 = vmatprep.subr.mxu0 0.0
        %258 = vmatpush1.msra.mxu0 0.0
        %259 = vmatprep.subr.mxu0 0.0
        %260 = vmatpush1.msra.mxu0 0.0
        %261 = vmatprep.subr.mxu0 0.0
        %262 = vmatpush1.msra.mxu0 0.0
        %263 = vmatprep.subr.mxu0 0.0
        %264 = vmatpush1.msra.mxu0 0.0
        %265 = vmatprep.subr.mxu0 0.0
        %266 = vmatpush1.msra.mxu0 0.0
        %267 = vmatprep.subr.mxu0 0.0
        %268 = vmatpush1.msra.mxu0 0.0
        %269 = vmatprep.subr.mxu0 0.0
        %270 = vmatpush1.msra.mxu0 0.0
        %271 = vmatprep.subr.mxu0 0.0
        %272 = vmatpush1.msra.mxu0 0.0
        %273 = vmatprep.subr.mxu0 0.0
        %274 = vmatpush1.msra.mxu0 0.0
        %275 = vmatprep.subr.mxu0 0.0
        %276 = vmatpush1.msra.mxu0 0.0
        %277 = vmatprep.subr.mxu0 0.0
        %278 = vmatpush1.msra.mxu0 0.0
        %279 = vmatprep.subr.mxu0 0.0
        %280 = vmatpush1.msra.mxu0 0.0
        %281 = vmatprep.subr.mxu0 0.0
        %282 = vmatpush1.msra.mxu0 0.0
        %283 = vmatprep.subr.mxu0 0.0
        %284 = vmatpush1.msra.mxu0 0.0
        %285 = vmatprep.subr.mxu0 0.0
        %286 = vmatpush1.msra.mxu0 0.0
        %287 = vmatprep.subr.mxu0 0.0
        %288 = vmatpush1.msra.mxu0 0.0
        %289 = vmatprep.subr.mxu0 0.0
        %290 = vmatpush1.msra.mxu0 0.0
        %291 = vmatprep.subr.mxu0 0.0
        %292 = vmatpush1.msra.mxu0 0.0
        %293 = vmatprep.subr.mxu0 0.0
        %294 = vmatpush1.msra.mxu0 0.0
        %295 = vmatprep.subr.mxu0 0.0
        %296 = vmatpush1.msra.mxu0 0.0
        %297 = vmatprep.subr.mxu0 0.0
        %298 = vmatpush1.msra.mxu0 0.0
        %299 = vmatprep.mubr.f32.mxu0 0.0
        %300 = vmatmul.mubr.f32.gmra.mrb[0].mxu0 %v233
        %v301 = vpop.f32.mrb[0].mxu0
        %v302 = vadd.f32 0.0, %v301
        %v303 = vpop.f32.mrb[0].mxu0
        %304 = vdwg.mxu0
        %305 = vadd.xlane.f32.xlu0 %v302
        %v306 = vpop.xlane.xlu0 %305
        %vm307 = vcmask 7168
        %308 = vst.msk [vmem:[%s225] sm:$0xff] %vm307, %v306
        %v309 = vmul.f32 %v302, %v302
        %310 = vadd.xlane.f32.xlu0 %v309
        %v311 = vpop.xlane.xlu0 %310
        %vm312 = vcmask 15368
        %313 = vst.msk [vmem:[%s225] sm:$0xff] %vm312, %v311
        %314 = vst [vmem:[%s221] sm:$0xff] %v302
        %p315 = scmp.lt.s32.totalorder %s15, 1
        %s316 = scalar_select %p315, %s15, 1
        %s317 = smul.addr %s316, 8
        %s318 = scalar_lea.vmem %s2, %s317
        %p319 = scmp.lt.s32.totalorder %s15, 1
        %s320 = scalar_select %p319, %s15, 1
        %s321 = smul.addr %s320, 8
        %s322 = scalar_lea.vmem %s3, %s321
        // Predicated region
        $region67: #{decoder_bottleneck_forward.4} parent=61 // pred_check
          %p323 = pneg %p80
        $region68: #{decoder_bottleneck_forward.4} parent=61 // pred_check_branch
          %325 = sbr.rel (%p323) target = $region70
        $region69: #{decoder_bottleneck_forward.4} parent=61 // pred_region
          _
        $region70: #{decoder_bottleneck_forward.4} parent=61 // pred_fallthru
          _
        // Predicated region
        $region71: #{decoder_bottleneck_forward.4} parent=61 // pred_check
          %p326 = pneg %p106
        $region72: #{decoder_bottleneck_forward.4} parent=61 // pred_check_branch
          %328 = sbr.rel (%p326) target = $region74
        $region73: #{decoder_bottleneck_forward.4} parent=61 // pred_region
          _
        $region74: #{decoder_bottleneck_forward.4} parent=61 // pred_fallthru
          _
      $region62: #{decoder_bottleneck_forward.4} parent=5 // pred_fallthru
        _
      %p329 = scmp.le.s32.totalorder 2, %s10
      // Predicated region
      $region75: #{decoder_bottleneck_forward.4} parent=5 // pred_check
        %p330 = pneg %p329
      $region76: #{decoder_bottleneck_forward.4} parent=5 // pred_check_branch
        %332 = sbr.rel (%p330) target = $region78
      $region77: #{decoder_bottleneck_forward.4} parent=5 // pred_region
        %s333 = ssub.s32 %s10, 2
        // Predicated region
        $region79: #{decoder_bottleneck_forward.4} parent=77 // pred_check
          %p334 = pneg %p86
        $region80: #{decoder_bottleneck_forward.4} parent=77 // pred_check_branch
          %336 = sbr.rel (%p334) target = $region82
        $region81: #{decoder_bottleneck_forward.4} parent=77 // pred_region
          %p337 = scmp.lt.s32.totalorder %s16, 1
          %s338 = scalar_select %p337, %s16, 1
          %s339 = smul.addr %s338, 8
          %s340 = scalar_lea.vmem %s2, %s339
        $region82: #{decoder_bottleneck_forward.4} parent=77 // pred_fallthru
          _
        // Predicated region
        $region83: #{decoder_bottleneck_forward.4} parent=77 // pred_check
          %p341 = pneg %p112
        $region84: #{decoder_bottleneck_forward.4} parent=77 // pred_check_branch
          %343 = sbr.rel (%p341) target = $region86
        $region85: #{decoder_bottleneck_forward.4} parent=77 // pred_region
          %p344 = scmp.lt.s32.totalorder %s16, 1
          %s345 = scalar_select %p344, %s16, 1
          %s346 = smul.addr %s345, 8
          %s347 = scalar_lea.vmem %s3, %s346
        $region86: #{decoder_bottleneck_forward.4} parent=77 // pred_fallthru
          _
      $region78: #{decoder_bottleneck_forward.4} parent=5 // pred_fallthru
        _
    $region6: #{decoder_bottleneck_forward.4} parent=1 // loop_footer
      %s14 = sadd.s32 1, %s10
    $region7: #{decoder_bottleneck_forward.4} parent=1 // loop_footer_branch
      %9 = sbr.rel target = $region3
    $region8: #{decoder_bottleneck_forward.4} parent=1 // loop_exit
      _

// kernel: decoder_bottleneck_forward.6
$region0: #{decoder_bottleneck_forward.6}
  #allocation0 [shape = 'u32[]', space=smem, size = 0x4, offset = 0x4, fixed_abs, tag = 'smem constant byte address 0x4 - core index']
  #allocation1 [shape = 'u32[144,128]{1,0:T(1,128)}', space=vmem, size = 0x12000, scoped, tag = 'internal scratch']
  %s0 = inlined_call_operand.vmem [shape: f32[8,2], index: 0, kind: input, shape index: {}]
  %s1 = inlined_call_operand.vmem [shape: f32[8,256], index: 1, kind: input, shape index: {}]
  %s2 = inlined_call_operand.vmem [shape: f32[32,8], index: 2, kind: input, shape index: {}]
  %s3 = inlined_call_operand.vmem [shape: f32[32,256], index: 3, kind: output, shape index: {0}]
  %s4 = inlined_call_operand.vmem [shape: f32[2,32,2], index: 4, kind: output, shape index: {1}]
  %5 = xla_tuple %s3, %s4
  %s6 = sld [smem:[#allocation0]]
  $region87: #{decoder_bottleneck_forward.6} parent=0
    _
  %s8 = ssub.s32 1, %s6
  %s9 = scalar_select 0, %s8, %s6
  $region1: #{decoder_bottleneck_forward.6} parent=0
    #allocation2 [shape = 'u8[32768]{0}', space=vmem, size = 0x8000, scoped, tag = 'output window, operand 0']
    loop: start=0, step=1, limit=4
    $region2: #{decoder_bottleneck_forward.6} parent=1 // loop_pre_header
      _
    $region3: #{decoder_bottleneck_forward.6} parent=1 // loop_header
      %s11 = sphi 0, %s15
      %p12 = scmp.ge.s32.totalorder %s11, 4
      %s19 = sphi 0, %s19
      %s21 = sphi 0, %s19
      %s22 = sphi 0, %s21
      %s36 = sphi 0, %s22
      %s42 = sphi 0, %s44
      %s45 = sphi 0, %s42
      %s46 = sphi 0, %s45
      %s62 = sphi 0, %s46
      %s66 = sphi 0, %s66
      %s68 = sphi 0, %s66
      %s69 = sphi 0, %s68
      %s83 = sphi 0, %s69
      %s89 = sphi 0, %s91
      %s92 = sphi 0, %s89
      %s93 = sphi 0, %s92
      %s109 = sphi 0, %s93
      %s115 = sphi 0, %s117
      %s118 = sphi 0, %s115
      %s119 = sphi 0, %s118
      %s135 = sphi 0, %s119
    $region4: #{decoder_bottleneck_forward.6} parent=1 // loop_header_branch
      %14 = sbr.rel (%p12) target = $region8
    $region5: #{decoder_bottleneck_forward.6} parent=1 // loop_body
      %s16 = ssub.s32 %s11, 1
      %s17 = ssub.s32 %s11, 2
      %s18 = sadd.s32 %s11, 1
      %s20 = sadd.s32 %s19, 1
      %p23 = scmp.eq.s32.totalorder %s11, 1
      %p24 = scmp.ne.s32.totalorder %s19, %s21
      %p25 = scmp.eq.s32.totalorder %s11, 0
      %p26 = por %p24, %p25
      %p27 = scmp.ne.s32.totalorder %s19, %s21
      %p28 = scmp.eq.s32.totalorder %s16, 1
      %p29 = por %p27, %p28
      %p30 = scmp.ne.s32.totalorder %s21, %s22
      %p31 = scmp.eq.s32.totalorder %s16, 0
      %p32 = por %p30, %p31
      %p33 = scmp.ne.s32.totalorder %s21, %s22
      %p34 = scmp.eq.s32.totalorder %s17, 1
      %p35 = por %p33, %p34
      %p37 = scmp.ne.s32.totalorder %s22, %s36
      %p38 = scmp.eq.s32.totalorder %s17, 0
      %p39 = por %p37, %p38
      %s40 = ssub.s32 %s11, %s18
      %p41 = scmp.eq.s32.totalorder %s40, 0
      %s43 = sadd.s32 %s42, 1
      %s44 = scalar_select %p41, %s42, %s43
      %p47 = pneg %p41
      %p48 = scmp.eq.s32.totalorder %s11, 1
      %p49 = por %p47, %p48
      %p50 = scmp.ne.s32.totalorder %s42, %s45
      %p51 = scmp.eq.s32.totalorder %s11, 0
      %p52 = por %p50, %p51
      %p53 = scmp.ne.s32.totalorder %s42, %s45
      %p54 = scmp.eq.s32.totalorder %s16, 1
      %p55 = por %p53, %p54
      %p56 = scmp.ne.s32.totalorder %s45, %s46
      %p57 = scmp.eq.s32.totalorder %s16, 0
      %p58 = por %p56, %p57
      %p59 = scmp.ne.s32.totalorder %s45, %s46
      %p60 = scmp.eq.s32.totalorder %s17, 1
      %p61 = por %p59, %p60
      %p63 = scmp.ne.s32.totalorder %s46, %s62
      %p64 = scmp.eq.s32.totalorder %s17, 0
      %p65 = por %p63, %p64
      %s67 = sadd.s32 %s66, 1
      %p70 = scmp.eq.s32.totalorder %s11, 1
      %p71 = scmp.ne.s32.totalorder %s66, %s68
      %p72 = scmp.eq.s32.totalorder %s11, 0
      %p73 = por %p71, %p72
      %p74 = scmp.ne.s32.totalorder %s66, %s68
      %p75 = scmp.eq.s32.totalorder %s16, 1
      %p76 = por %p74, %p75
      %p77 = scmp.ne.s32.totalorder %s68, %s69
      %p78 = scmp.eq.s32.totalorder %s16, 0
      %p79 = por %p77, %p78
      %p80 = scmp.ne.s32.totalorder %s68, %s69
      %p81 = scmp.eq.s32.totalorder %s17, 1
      %p82 = por %p80, %p81
      %p84 = scmp.ne.s32.totalorder %s69, %s83
      %p85 = scmp.eq.s32.totalorder %s17, 0
      %p86 = por %p84, %p85
      %s87 = ssub.s32 %s11, %s18
      %p88 = scmp.eq.s32.totalorder %s87, 0
      %s90 = sadd.s32 %s89, 1
      %s91 = scalar_select %p88, %s89, %s90
      %p94 = pneg %p88
      %p95 = scmp.eq.s32.totalorder %s11, 1
      %p96 = por %p94, %p95
      %p97 = scmp.ne.s32.totalorder %s89, %s92
      %p98 = scmp.eq.s32.totalorder %s11, 0
      %p99 = por %p97, %p98
      %p100 = scmp.ne.s32.totalorder %s89, %s92
      %p101 = scmp.eq.s32.totalorder %s16, 1
      %p102 = por %p100, %p101
      %p103 = scmp.ne.s32.totalorder %s92, %s93
      %p104 = scmp.eq.s32.totalorder %s16, 0
      %p105 = por %p103, %p104
      %p106 = scmp.ne.s32.totalorder %s92, %s93
      %p107 = scmp.eq.s32.totalorder %s17, 1
      %p108 = por %p106, %p107
      %p110 = scmp.ne.s32.totalorder %s93, %s109
      %p111 = scmp.eq.s32.totalorder %s17, 0
      %p112 = por %p110, %p111
      %s113 = ssub.s32 %s11, %s18
      %p114 = scmp.eq.s32.totalorder %s113, 0
      %s116 = sadd.s32 %s115, 1
      %s117 = scalar_select %p114, %s115, %s116
      %p120 = pneg %p114
      %p121 = scmp.eq.s32.totalorder %s11, 1
      %p122 = por %p120, %p121
      %p123 = scmp.ne.s32.totalorder %s115, %s118
      %p124 = scmp.eq.s32.totalorder %s11, 0
      %p125 = por %p123, %p124
      %p126 = scmp.ne.s32.totalorder %s115, %s118
      %p127 = scmp.eq.s32.totalorder %s16, 1
      %p128 = por %p126, %p127
      %p129 = scmp.ne.s32.totalorder %s118, %s119
      %p130 = scmp.eq.s32.totalorder %s16, 0
      %p131 = por %p129, %p130
      %p132 = scmp.ne.s32.totalorder %s118, %s119
      %p133 = scmp.eq.s32.totalorder %s17, 1
      %p134 = por %p132, %p133
      %p136 = scmp.ne.s32.totalorder %s119, %s135
      %p137 = scmp.eq.s32.totalorder %s17, 0
      %p138 = por %p136, %p137
      %p139 = scmp.le.s32.totalorder 1, %s11
      %p140 = scmp.lt.s32.totalorder %s11, 3
      %p141 = pnand %p139, %p140
      %p142 = pneg %p141
      // Predicated region
      $region9: #{decoder_bottleneck_forward.6} parent=5 // pred_check
        _
      $region10: #{decoder_bottleneck_forward.6} parent=5 // pred_check_branch
        %144 = sbr.rel (%p141) target = $region12
      $region11: #{decoder_bottleneck_forward.6} parent=5 // pred_region
        %s145 = ssub.s32 %s11, 1
        // Predicated region
        $region13: #{decoder_bottleneck_forward.6} parent=11 // pred_check
          %p146 = pneg %p32
        $region14: #{decoder_bottleneck_forward.6} parent=11 // pred_check_branch
          %148 = sbr.rel (%p146) target = $region16
        $region15: #{decoder_bottleneck_forward.6} parent=11 // pred_region
          _
        $region16: #{decoder_bottleneck_forward.6} parent=11 // pred_fallthru
          _
        // Predicated region
        $region17: #{decoder_bottleneck_forward.6} parent=11 // pred_check
          %p149 = pneg %p79
        $region18: #{decoder_bottleneck_forward.6} parent=11 // pred_check_branch
          %151 = sbr.rel (%p149) target = $region20
        $region19: #{decoder_bottleneck_forward.6} parent=11 // pred_region
          _
        $region20: #{decoder_bottleneck_forward.6} parent=11 // pred_fallthru
          _
      $region12: #{decoder_bottleneck_forward.6} parent=5 // pred_fallthru
        _
      %p152 = scmp.lt.s32.totalorder %s11, 2
      // Predicated region
      $region21: #{decoder_bottleneck_forward.6} parent=5 // pred_check
        %p153 = pneg %p152
      $region22: #{decoder_bottleneck_forward.6} parent=5 // pred_check_branch
        %155 = sbr.rel (%p153) target = $region24
      $region23: #{decoder_bottleneck_forward.6} parent=5 // pred_region
        // Predicated region
        $region25: #{decoder_bottleneck_forward.6} parent=23 // pred_check
          %p156 = pneg %p52
        $region26: #{decoder_bottleneck_forward.6} parent=23 // pred_check_branch
          %158 = sbr.rel (%p156) target = $region28
        $region27: #{decoder_bottleneck_forward.6} parent=23 // pred_region
          %p159 = scmp.lt.s32.totalorder %s11, 1
          %s160 = scalar_select %p159, %s11, 1
          %s161 = smul.addr %s160, 8
          %s162 = scalar_lea.vmem %s1, %s161
        $region28: #{decoder_bottleneck_forward.6} parent=23 // pred_fallthru
          _
      $region24: #{decoder_bottleneck_forward.6} parent=5 // pred_fallthru
        _
      %p163 = scmp.le.s32.totalorder 1, %s11
      %p164 = scmp.lt.s32.totalorder %s11, 3
      %p165 = pnand %p163, %p164
      %p166 = pneg %p165
      // Predicated region
      $region29: #{decoder_bottleneck_forward.6} parent=5 // pred_check
        _
      $region30: #{decoder_bottleneck_forward.6} parent=5 // pred_check_branch
        %168 = sbr.rel (%p165) target = $region32
      $region31: #{decoder_bottleneck_forward.6} parent=5 // pred_region
        %s169 = ssub.s32 %s11, 1
        %p170 = pneg %p32
        %p171 = pneg %p29
        %p172 = scmp.lt.s32.totalorder %s16, 1
        %s173 = scalar_select %p172, %s16, 1
        %s174 = smul.addr %s173, 8
        %s175 = scalar_lea.vmem %s1, %s174
        %p176 = pneg %p58
        %p177 = pneg %p55
        %p178 = pneg %p79
        %p179 = pneg %p76
        %p180 = pneg %p105
        %p181 = pneg %p102
        %s182 = sand.u32 %s92, 1
        %s183 = sand.u32 %s92, 1
        %s184 = smul.addr %s183, 32
        %s185 = scalar_lea.vmem [#allocation2], %s184
        %p186 = pneg %p131
        %p187 = pneg %p128
        %p188 = scmp.lt.s32.totalorder %s16, 1
        %s189 = scalar_select %p188, %s16, 1
        %s190 = smul.addr %s189, 4
        %s191 = smul.addr %s190, 8
        %s192 = scalar_lea.vmem %s4, %s191
        %p193 = scmp.lt.s32.totalorder %s16, 1
        %s194 = scalar_select %p193, %s16, 1
        %s195 = smul.addr %s194, 8
        %s196 = scalar_lea.vmem %s1, %s195
        %p197 = scmp.lt.s32.totalorder %s16, 1
        %s198 = scalar_select %p197, %s16, 1
        %s199 = smul.addr %s198, 4
        %s200 = smul.addr %s199, 8
        %s201 = scalar_lea.vmem %s4, %s200
        %v202 = vld [vmem:[%s196] sm:$0xff]
        %v203 = vld [vmem:[%s0] sm:$0xff]
        %205 = vset.pattern.permute.xlu0 0
        %206 = vperm.xlu0 %205, %v203
        %v207 = vpop.permute.xlu0 %206
        %v209 = vmul.f32 %v202, %v207
        %210 = vset.pattern.permute.xlu0 1
        %211 = vperm.xlu0 %210, %v203
        %v212 = vpop.permute.xlu0 %211
        %v214 = vadd.f32 %v209, %v212
        %vm215 = vcmp.gt.f32.partialorder %v214, 0.0
        %v216 = vmin.f32 %v214, 0.0
        %v217 = vmul.f32 %v216, 1.442695
        %v218 = vpow.pop %v217
        %v219 = vsub.f32 %v218, 1.0
        %v220 = vsel %vm215, %v214, %v219
        %v221 = vld [vmem:[%s2] sm:$0xff]
        %v222 = vld [vmem:[%s2 + $0x8] sm:$0xff]
        %v223 = vld [vmem:[%s2 + $0x10] sm:$0xff]
        %v224 = vld [vmem:[%s2 + $0x18] sm:$0xff]
        %vm225 = vcmask 64512
        %v227 = vsel %vm225, %v221, 0
        %v230 = vsel %vm225, %v222, 0
        %v233 = vsel %vm225, %v223, 0
        %v236 = vsel %vm225, %v224, 0
        %238 = vmatprep.subr.mxu0 0.0
        %239 = vmatpush1.msra.mxu0 %v220
        %240 = vmatprep.subr.mxu0 0.0
        %241 = vmatpush1.msra.mxu0 0.0
        %242 = vmatprep.subr.mxu0 0.0
        %243 = vmatpush1.msra.mxu0 0.0
        %244 = vmatprep.subr.mxu0 0.0
        %245 = vmatpush1.msra.mxu0 0.0
        %246 = vmatprep.subr.mxu0 0.0
        %247 = vmatpush1.msra.mxu0 0.0
        %248 = vmatprep.subr.mxu0 0.0
        %249 = vmatpush1.msra.mxu0 0.0
        %250 = vmatprep.subr.mxu0 0.0
        %251 = vmatpush1.msra.mxu0 0.0
        %252 = vmatprep.subr.mxu0 0.0
        %253 = vmatpush1.msra.mxu0 0.0
        %254 = vmatprep.subr.mxu0 0.0
        %255 = vmatpush1.msra.mxu0 0.0
        %256 = vmatprep.subr.mxu0 0.0
        %257 = vmatpush1.msra.mxu0 0.0
        %258 = vmatprep.subr.mxu0 0.0
        %259 = vmatpush1.msra.mxu0 0.0
        %260 = vmatprep.subr.mxu0 0.0
        %261 = vmatpush1.msra.mxu0 0.0
        %262 = vmatprep.subr.mxu0 0.0
        %263 = vmatpush1.msra.mxu0 0.0
        %264 = vmatprep.subr.mxu0 0.0
        %265 = vmatpush1.msra.mxu0 0.0
        %266 = vmatprep.subr.mxu0 0.0
        %267 = vmatpush1.msra.mxu0 0.0
        %268 = vmatprep.subr.mxu0 0.0
        %269 = vmatpush1.msra.mxu0 0.0
        %270 = vmatprep.subr.mxu0 0.0
        %271 = vmatpush1.msra.mxu0 0.0
        %272 = vmatprep.subr.mxu0 0.0
        %273 = vmatpush1.msra.mxu0 0.0
        %274 = vmatprep.subr.mxu0 0.0
        %275 = vmatpush1.msra.mxu0 0.0
        %276 = vmatprep.subr.mxu0 0.0
        %277 = vmatpush1.msra.mxu0 0.0
        %278 = vmatprep.subr.mxu0 0.0
        %279 = vmatpush1.msra.mxu0 0.0
        %280 = vmatprep.subr.mxu0 0.0
        %281 = vmatpush1.msra.mxu0 0.0
        %282 = vmatprep.subr.mxu0 0.0
        %283 = vmatpush1.msra.mxu0 0.0
        %284 = vmatprep.subr.mxu0 0.0
        %285 = vmatpush1.msra.mxu0 0.0
        %286 = vmatprep.subr.mxu0 0.0
        %287 = vmatpush1.msra.mxu0 0.0
        %288 = vmatprep.subr.mxu0 0.0
        %289 = vmatpush1.msra.mxu0 0.0
        %290 = vmatprep.subr.mxu0 0.0
        %291 = vmatpush1.msra.mxu0 0.0
        %292 = vmatprep.subr.mxu0 0.0
        %293 = vmatpush1.msra.mxu0 0.0
        %294 = vmatprep.subr.mxu0 0.0
        %295 = vmatpush1.msra.mxu0 0.0
        %296 = vmatprep.subr.mxu0 0.0
        %297 = vmatpush1.msra.mxu0 0.0
        %298 = vmatprep.subr.mxu0 0.0
        %299 = vmatpush1.msra.mxu0 0.0
        %300 = vmatprep.subr.mxu0 0.0
        %301 = vmatpush1.msra.mxu0 0.0
        %302 = vmatprep.mubr.f32.mxu0 0.0
        %303 = vmatmul.mubr.f32.gmra.mrb[0].mxu0 %v227
        %v304 = vpop.f32.mrb[0].mxu0
        %v305 = vadd.f32 0.0, %v304
        %v306 = vpop.f32.mrb[0].mxu0
        %307 = vmatprep.mubr.f32.mxu0 0.0
        %308 = vmatmul.mubr.f32.gmra.mrb[0].mxu0 %v230
        %v309 = vpop.f32.mrb[0].mxu0
        %v310 = vadd.f32 0.0, %v309
        %v311 = vpop.f32.mrb[0].mxu0
        %312 = vmatprep.mubr.f32.mxu0 0.0
        %313 = vmatmul.mubr.f32.gmra.mrb[0].mxu0 %v233
        %v314 = vpop.f32.mrb[0].mxu0
        %v315 = vadd.f32 0.0, %v314
        %v316 = vpop.f32.mrb[0].mxu0
        %317 = vmatprep.mubr.f32.mxu0 0.0
        %318 = vmatmul.mubr.f32.gmra.mrb[0].mxu0 %v236
        %v319 = vpop.f32.mrb[0].mxu0
        %v320 = vadd.f32 0.0, %v319
        %v321 = vpop.f32.mrb[0].mxu0
        %322 = vdwg.mxu0
        %323 = vadd.xlane.f32.xlu0 %v305
        %v324 = vpop.xlane.xlu0 %323
        %325 = vadd.xlane.f32.xlu0 %v310
        %v326 = vpop.xlane.xlu0 %325
        %327 = vadd.xlane.f32.xlu0 %v315
        %v328 = vpop.xlane.xlu0 %327
        %329 = vadd.xlane.f32.xlu0 %v320
        %v330 = vpop.xlane.xlu0 %329
        %vm331 = vcmask 7168
        %332 = vst.msk [vmem:[%s201] sm:$0xff] %vm331, %v324
        %333 = vst.msk [vmem:[%s201 + $0x8] sm:$0xff] %vm331, %v326
        %334 = vst.msk [vmem:[%s201 + $0x10] sm:$0xff] %vm331, %v328
        %335 = vst.msk [vmem:[%s201 + $0x18] sm:$0xff] %vm331, %v330
        %v336 = vmul.f32 %v305, %v305
        %v337 = vmul.f32 %v310, %v310
        %v338 = vmul.f32 %v315, %v315
        %v339 = vmul.f32 %v320, %v320
        %340 = vadd.xlane.f32.xlu0 %v336
        %v341 = vpop.xlane.xlu0 %340
        %342 = vadd.xlane.f32.xlu0 %v337
        %v343 = vpop.xlane.xlu0 %342
        %344 = vadd.xlane.f32.xlu0 %v338
        %v345 = vpop.xlane.xlu0 %344
        %346 = vadd.xlane.f32.xlu0 %v339
        %v347 = vpop.xlane.xlu0 %346
        %vm348 = vcmask 15368
        %349 = vst.msk [vmem:[%s201] sm:$0xff] %vm348, %v341
        %350 = vst.msk [vmem:[%s201 + $0x8] sm:$0xff] %vm348, %v343
        %351 = vst.msk [vmem:[%s201 + $0x10] sm:$0xff] %vm348, %v345
        %352 = vst.msk [vmem:[%s201 + $0x18] sm:$0xff] %vm348, %v347
        %353 = vst [vmem:[%s185] sm:$0xff] %v305
        %354 = vst [vmem:[%s185 + $0x8] sm:$0xff] %v310
        %355 = vst [vmem:[%s185 + $0x10] sm:$0xff] %v315
        %356 = vst [vmem:[%s185 + $0x18] sm:$0xff] %v320
        %s357 = sand.u32 %s92, 1
        %s358 = sand.u32 %s92, 1
        %s359 = smul.addr %s358, 32
        %s360 = scalar_lea.vmem [#allocation2], %s359
        %p361 = scmp.lt.s32.totalorder %s16, 1
        %s362 = scalar_select %p361, %s16, 1
        %s363 = smul.addr %s362, 4
        %s364 = smul.addr %s363, 8
        %s365 = scalar_lea.vmem %s4, %s364
        // Predicated region
        $region33: #{decoder_bottleneck_forward.6} parent=31 // pred_check
          %p366 = pneg %p102
        $region34: #{decoder_bottleneck_forward.6} parent=31 // pred_check_branch
          %368 = sbr.rel (%p366) target = $region36
        $region35: #{decoder_bottleneck_forward.6} parent=31 // pred_region
          %s369 = smul.addr %s16, 8
          %s370 = scalar_lea.vmem %s3, %s369
          // Predicated region
          $region37: #{decoder_bottleneck_forward.6} parent=35 // pred_check
            _
          $region38: #{decoder_bottleneck_forward.6} parent=35 // pred_check_branch
            %372 = sbr.rel (0) target = $region40
          $region39: #{decoder_bottleneck_forward.6} parent=35 // pred_region
            // Predicated region
            $region41: #{decoder_bottleneck_forward.6} parent=39 // pred_check
              _
            $region42: #{decoder_bottleneck_forward.6} parent=39 // pred_check_branch
              %374 = sbr.rel (0) target = $region44
            $region43: #{decoder_bottleneck_forward.6} parent=39 // pred_region
              // Predicated region
              $region56: #{decoder_bottleneck_forward.6} parent=43 // pred_check
                _
              $region57: #{decoder_bottleneck_forward.6} parent=43 // pred_check_branch
                %395 = sbr.rel (0) target = $region59
              $region58: #{decoder_bottleneck_forward.6} parent=43 // pred_region
                loop: start=0, step=1, limit=1
                $region60: #{decoder_bottleneck_forward.6} parent=58 // loop_pre_header
                  _
                $region61: #{decoder_bottleneck_forward.6} parent=58 // loop_header
                  %s397 = sphi 0, %s401
                  %p398 = scmp.ge.s32.totalorder %s397, 1
                  %s402 = sphi %s360, %s360
                  %s403 = sphi %s370, %s370
                $region62: #{decoder_bottleneck_forward.6} parent=58 // loop_header_branch
                  %400 = sbr.rel (%p398) target = $region66
                $region63: #{decoder_bottleneck_forward.6} parent=58 // loop_body
                  %v404 = vld [vmem:[%s402] sm:$0xff]
                  %405 = vst [vmem:[%s403] sm:$0xff] %v404
                  %v406 = vld [vmem:[%s402 + $0x8] sm:$0xff]
                  %407 = vst [vmem:[%s403 + $0x10] sm:$0xff] %v406
                  %v408 = vld [vmem:[%s402 + $0x10] sm:$0xff]
                  %409 = vst [vmem:[%s403 + $0x20] sm:$0xff] %v408
                  %v410 = vld [vmem:[%s402 + $0x18] sm:$0xff]
                  %411 = vst [vmem:[%s403 + $0x30] sm:$0xff] %v410
                $region64: #{decoder_bottleneck_forward.6} parent=58 // loop_footer
                  %s401 = sadd.s32 1, %s397
                $region65: #{decoder_bottleneck_forward.6} parent=58 // loop_footer_branch
                  %396 = sbr.rel target = $region61
                $region66: #{decoder_bottleneck_forward.6} parent=58 // loop_exit
                  _
              $region59: #{decoder_bottleneck_forward.6} parent=43 // pred_fallthru
                _
              // Predicated region
              $region67: #{decoder_bottleneck_forward.6} parent=43 // pred_check
                _
              $region68: #{decoder_bottleneck_forward.6} parent=43 // pred_check_branch
                %413 = sbr.rel target = $region70
              $region69: #{decoder_bottleneck_forward.6} parent=43 // pred_region
                _
              $region70: #{decoder_bottleneck_forward.6} parent=43 // pred_fallthru
                _
            $region44: #{decoder_bottleneck_forward.6} parent=39 // pred_fallthru
              _
            // Predicated region
            $region45: #{decoder_bottleneck_forward.6} parent=39 // pred_check
              _
            $region46: #{decoder_bottleneck_forward.6} parent=39 // pred_check_branch
              %376 = sbr.rel target = $region48
            $region47: #{decoder_bottleneck_forward.6} parent=39 // pred_region
              loop: start=0, step=1, limit=1
              $region49: #{decoder_bottleneck_forward.6} parent=47 // loop_pre_header
                _
              $region50: #{decoder_bottleneck_forward.6} parent=47 // loop_header
                %s379 = sphi 0, %s383
                %p380 = scmp.ge.s32.totalorder %s379, 1
                %s384 = sphi %s360, %s360
                %s385 = sphi %s370, %s370
              $region51: #{decoder_bottleneck_forward.6} parent=47 // loop_header_branch
                %382 = sbr.rel (%p380) target = $region55
              $region52: #{decoder_bottleneck_forward.6} parent=47 // loop_body
                %v386 = vld [vmem:[%s384] sm:$0xff]
                %387 = vst [vmem:[%s385] sm:$0xff] %v386
                %v388 = vld [vmem:[%s384 + $0x8] sm:$0xff]
                %389 = vst [vmem:[%s385 + $0x10] sm:$0xff] %v388
                %v390 = vld [vmem:[%s384 + $0x10] sm:$0xff]
                %391 = vst [vmem:[%s385 + $0x20] sm:$0xff] %v390
                %v392 = vld [vmem:[%s384 + $0x18] sm:$0xff]
                %393 = vst [vmem:[%s385 + $0x30] sm:$0xff] %v392
              $region53: #{decoder_bottleneck_forward.6} parent=47 // loop_footer
                %s383 = sadd.s32 1, %s379
              $region54: #{decoder_bottleneck_forward.6} parent=47 // loop_footer_branch
                %378 = sbr.rel target = $region50
              $region55: #{decoder_bottleneck_forward.6} parent=47 // loop_exit
                _
            $region48: #{decoder_bottleneck_forward.6} parent=39 // pred_fallthru
              _
          $region40: #{decoder_bottleneck_forward.6} parent=35 // pred_fallthru
            _
          %414 = vnop
        $region36: #{decoder_bottleneck_forward.6} parent=31 // pred_fallthru
          _
        // Predicated region
        $region71: #{decoder_bottleneck_forward.6} parent=31 // pred_check
          %p415 = pneg %p128
        $region72: #{decoder_bottleneck_forward.6} parent=31 // pred_check_branch
          %417 = sbr.rel (%p415) target = $region74
        $region73: #{decoder_bottleneck_forward.6} parent=31 // pred_region
          _
        $region74: #{decoder_bottleneck_forward.6} parent=31 // pred_fallthru
          _
      $region32: #{decoder_bottleneck_forward.6} parent=5 // pred_fallthru
        _
      %p418 = scmp.le.s32.totalorder 2, %s11
      // Predicated region
      $region75: #{decoder_bottleneck_forward.6} parent=5 // pred_check
        %p419 = pneg %p418
      $region76: #{decoder_bottleneck_forward.6} parent=5 // pred_check_branch
        %421 = sbr.rel (%p419) target = $region78
      $region77: #{decoder_bottleneck_forward.6} parent=5 // pred_region
        %s422 = ssub.s32 %s11, 2
        // Predicated region
        $region79: #{decoder_bottleneck_forward.6} parent=77 // pred_check
          %p423 = pneg %p108
        $region80: #{decoder_bottleneck_forward.6} parent=77 // pred_check_branch
          %425 = sbr.rel (%p423) target = $region82
        $region81: #{decoder_bottleneck_forward.6} parent=77 // pred_region
          %s426 = sand.u32 %s93, 1
          %s427 = sand.u32 %s93, 1
          %s428 = smul.addr %s427, 32
          %s429 = scalar_lea.vmem [#allocation2], %s428
        $region82: #{decoder_bottleneck_forward.6} parent=77 // pred_fallthru
          _
        // Predicated region
        $region83: #{decoder_bottleneck_forward.6} parent=77 // pred_check
          %p430 = pneg %p134
        $region84: #{decoder_bottleneck_forward.6} parent=77 // pred_check_branch
          %432 = sbr.rel (%p430) target = $region86
        $region85: #{decoder_bottleneck_forward.6} parent=77 // pred_region
          %p433 = scmp.lt.s32.totalorder %s17, 1
          %s434 = scalar_select %p433, %s17, 1
          %s435 = smul.addr %s434, 4
          %s436 = smul.addr %s435, 8
          %s437 = scalar_lea.vmem %s4, %s436
        $region86: #{decoder_bottleneck_forward.6} parent=77 // pred_fallthru
          _
      $region78: #{decoder_bottleneck_forward.6} parent=5 // pred_fallthru
        _
    $region6: #{decoder_bottleneck_forward.6} parent=1 // loop_footer
      %s15 = sadd.s32 1, %s11
    $region7: #{decoder_bottleneck_forward.6} parent=1 // loop_footer_branch
      %10 = sbr.rel target = $region3
    $region8: #{decoder_bottleneck_forward.6} parent=1 // loop_exit
      _

// kernel: decoder_bottleneck_forward.5
$region0: #{decoder_bottleneck_forward.5}
  #allocation0 [shape = 'u32[]', space=smem, size = 0x4, offset = 0x4, fixed_abs, tag = 'smem constant byte address 0x4 - core index']
  #allocation1 [shape = 'u32[144,128]{1,0:T(1,128)}', space=vmem, size = 0x12000, scoped, tag = 'internal scratch']
  %s0 = inlined_call_operand.vmem [shape: f32[8,2], index: 0, kind: input, shape index: {}]
  %s1 = inlined_call_operand.vmem [shape: f32[2,128], index: 1, kind: input, shape index: {}]
  %s2 = inlined_call_operand.vmem [shape: f32[8,256], index: 2, kind: input, shape index: {}]
  %s3 = inlined_call_operand.vmem [shape: f32[8,24], index: 3, kind: input, shape index: {}]
  %s4 = inlined_call_operand.vmem [shape: f32[8,256], index: 4, kind: output, shape index: {0}]
  %s5 = inlined_call_operand.vmem [shape: f32[2,8,2], index: 5, kind: output, shape index: {1}]
  %6 = xla_tuple %s4, %s5
  %s7 = sld [smem:[#allocation0]]
  $region57: #{decoder_bottleneck_forward.5} parent=0
    _
  %s9 = ssub.s32 1, %s7
  %s10 = scalar_select 0, %s9, %s7
  loop: start=0, step=1, limit=4
  $region2: #{decoder_bottleneck_forward.5} parent=0 // loop_pre_header
    _
  $region3: #{decoder_bottleneck_forward.5} parent=0 // loop_header
    %s12 = sphi 0, %s16
    %p13 = scmp.ge.s32.totalorder %s12, 4
    %s20 = sphi 0, %s20
    %s22 = sphi 0, %s20
    %s23 = sphi 0, %s22
    %s37 = sphi 0, %s23
    %s41 = sphi 0, %s41
    %s43 = sphi 0, %s41
    %s44 = sphi 0, %s43
    %s58 = sphi 0, %s44
    %s64 = sphi 0, %s66
    %s67 = sphi 0, %s64
    %s68 = sphi 0, %s67
    %s84 = sphi 0, %s68
    %s88 = sphi 0, %s88
    %s90 = sphi 0, %s88
    %s91 = sphi 0, %s90
    %s105 = sphi 0, %s91
    %s111 = sphi 0, %s113
    %s114 = sphi 0, %s111
    %s115 = sphi 0, %s114
    %s131 = sphi 0, %s115
    %s137 = sphi 0, %s139
    %s140 = sphi 0, %s137
    %s141 = sphi 0, %s140
    %s157 = sphi 0, %s141
  $region4: #{decoder_bottleneck_forward.5} parent=0 // loop_header_branch
    %15 = sbr.rel (%p13) target = $region8
  $region5: #{decoder_bottleneck_forward.5} parent=0 // loop_body
    %s17 = ssub.s32 %s12, 1
    %s18 = ssub.s32 %s12, 2
    %s19 = sadd.s32 %s12, 1
    %s21 = sadd.s32 %s20, 1
    %p24 = scmp.eq.s32.totalorder %s12, 1
    %p25 = scmp.ne.s32.totalorder %s20, %s22
    %p26 = scmp.eq.s32.totalorder %s12, 0
    %p27 = por %p25, %p26
    %p28 = scmp.ne.s32.totalorder %s20, %s22
    %p29 = scmp.eq.s32.totalorder %s17, 1
    %p30 = por %p28, %p29
    %p31 = scmp.ne.s32.totalorder %s22, %s23
    %p32 = scmp.eq.s32.totalorder %s17, 0
    %p33 = por %p31, %p32
    %p34 = scmp.ne.s32.totalorder %s22, %s23
    %p35 = scmp.eq.s32.totalorder %s18, 1
    %p36 = por %p34, %p35
    %p38 = scmp.ne.s32.totalorder %s23, %s37
    %p39 = scmp.eq.s32.totalorder %s18, 0
    %p40 = por %p38, %p39
    %s42 = sadd.s32 %s41, 1
    %p45 = scmp.eq.s32.totalorder %s12, 1
    %p46 = scmp.ne.s32.totalorder %s41, %s43
    %p47 = scmp.eq.s32.totalorder %s12, 0
    %p48 = por %p46, %p47
    %p49 = scmp.ne.s32.totalorder %s41, %s43
    %p50 = scmp.eq.s32.totalorder %s17, 1
    %p51 = por %p49, %p50
    %p52 = scmp.ne.s32.totalorder %s43, %s44
    %p53 = scmp.eq.s32.totalorder %s17, 0
    %p54 = por %p52, %p53
    %p55 = scmp.ne.s32.totalorder %s43, %s44
    %p56 = scmp.eq.s32.totalorder %s18, 1
    %p57 = por %p55, %p56
    %p59 = scmp.ne.s32.totalorder %s44, %s58
    %p60 = scmp.eq.s32.totalorder %s18, 0
    %p61 = por %p59, %p60
    %s62 = ssub.s32 %s12, %s19
    %p63 = scmp.eq.s32.totalorder %s62, 0
    %s65 = sadd.s32 %s64, 1
    %s66 = scalar_select %p63, %s64, %s65
    %p69 = pneg %p63
    %p70 = scmp.eq.s32.totalorder %s12, 1
    %p71 = por %p69, %p70
    %p72 = scmp.ne.s32.totalorder %s64, %s67
    %p73 = scmp.eq.s32.totalorder %s12, 0
    %p74 = por %p72, %p73
    %p75 = scmp.ne.s32.totalorder %s64, %s67
    %p76 = scmp.eq.s32.totalorder %s17, 1
    %p77 = por %p75, %p76
    %p78 = scmp.ne.s32.totalorder %s67, %s68
    %p79 = scmp.eq.s32.totalorder %s17, 0
    %p80 = por %p78, %p79
    %p81 = scmp.ne.s32.totalorder %s67, %s68
    %p82 = scmp.eq.s32.totalorder %s18, 1
    %p83 = por %p81, %p82
    %p85 = scmp.ne.s32.totalorder %s68, %s84
    %p86 = scmp.eq.s32.totalorder %s18, 0
    %p87 = por %p85, %p86
    %s89 = sadd.s32 %s88, 1
    %p92 = scmp.eq.s32.totalorder %s12, 1
    %p93 = scmp.ne.s32.totalorder %s88, %s90
    %p94 = scmp.eq.s32.totalorder %s12, 0
    %p95 = por %p93, %p94
    %p96 = scmp.ne.s32.totalorder %s88, %s90
    %p97 = scmp.eq.s32.totalorder %s17, 1
    %p98 = por %p96, %p97
    %p99 = scmp.ne.s32.totalorder %s90, %s91
    %p100 = scmp.eq.s32.totalorder %s17, 0
    %p101 = por %p99, %p100
    %p102 = scmp.ne.s32.totalorder %s90, %s91
    %p103 = scmp.eq.s32.totalorder %s18, 1
    %p104 = por %p102, %p103
    %p106 = scmp.ne.s32.totalorder %s91, %s105
    %p107 = scmp.eq.s32.totalorder %s18, 0
    %p108 = por %p106, %p107
    %s109 = ssub.s32 %s12, %s19
    %p110 = scmp.eq.s32.totalorder %s109, 0
    %s112 = sadd.s32 %s111, 1
    %s113 = scalar_select %p110, %s111, %s112
    %p116 = pneg %p110
    %p117 = scmp.eq.s32.totalorder %s12, 1
    %p118 = por %p116, %p117
    %p119 = scmp.ne.s32.totalorder %s111, %s114
    %p120 = scmp.eq.s32.totalorder %s12, 0
    %p121 = por %p119, %p120
    %p122 = scmp.ne.s32.totalorder %s111, %s114
    %p123 = scmp.eq.s32.totalorder %s17, 1
    %p124 = por %p122, %p123
    %p125 = scmp.ne.s32.totalorder %s114, %s115
    %p126 = scmp.eq.s32.totalorder %s17, 0
    %p127 = por %p125, %p126
    %p128 = scmp.ne.s32.totalorder %s114, %s115
    %p129 = scmp.eq.s32.totalorder %s18, 1
    %p130 = por %p128, %p129
    %p132 = scmp.ne.s32.totalorder %s115, %s131
    %p133 = scmp.eq.s32.totalorder %s18, 0
    %p134 = por %p132, %p133
    %s135 = ssub.s32 %s12, %s19
    %p136 = scmp.eq.s32.totalorder %s135, 0
    %s138 = sadd.s32 %s137, 1
    %s139 = scalar_select %p136, %s137, %s138
    %p142 = pneg %p136
    %p143 = scmp.eq.s32.totalorder %s12, 1
    %p144 = por %p142, %p143
    %p145 = scmp.ne.s32.totalorder %s137, %s140
    %p146 = scmp.eq.s32.totalorder %s12, 0
    %p147 = por %p145, %p146
    %p148 = scmp.ne.s32.totalorder %s137, %s140
    %p149 = scmp.eq.s32.totalorder %s17, 1
    %p150 = por %p148, %p149
    %p151 = scmp.ne.s32.totalorder %s140, %s141
    %p152 = scmp.eq.s32.totalorder %s17, 0
    %p153 = por %p151, %p152
    %p154 = scmp.ne.s32.totalorder %s140, %s141
    %p155 = scmp.eq.s32.totalorder %s18, 1
    %p156 = por %p154, %p155
    %p158 = scmp.ne.s32.totalorder %s141, %s157
    %p159 = scmp.eq.s32.totalorder %s18, 0
    %p160 = por %p158, %p159
    %p161 = scmp.le.s32.totalorder 1, %s12
    %p162 = scmp.lt.s32.totalorder %s12, 3
    %p163 = pnand %p161, %p162
    %p164 = pneg %p163
    // Predicated region
    $region9: #{decoder_bottleneck_forward.5} parent=5 // pred_check
      _
    $region10: #{decoder_bottleneck_forward.5} parent=5 // pred_check_branch
      %166 = sbr.rel (%p163) target = $region12
    $region11: #{decoder_bottleneck_forward.5} parent=5 // pred_region
      %s167 = ssub.s32 %s12, 1
      // Predicated region
      $region13: #{decoder_bottleneck_forward.5} parent=11 // pred_check
        %p168 = pneg %p33
      $region14: #{decoder_bottleneck_forward.5} parent=11 // pred_check_branch
        %170 = sbr.rel (%p168) target = $region16
      $region15: #{decoder_bottleneck_forward.5} parent=11 // pred_region
        _
      $region16: #{decoder_bottleneck_forward.5} parent=11 // pred_fallthru
        _
      // Predicated region
      $region17: #{decoder_bottleneck_forward.5} parent=11 // pred_check
        %p171 = pneg %p54
      $region18: #{decoder_bottleneck_forward.5} parent=11 // pred_check_branch
        %173 = sbr.rel (%p171) target = $region20
      $region19: #{decoder_bottleneck_forward.5} parent=11 // pred_region
        _
      $region20: #{decoder_bottleneck_forward.5} parent=11 // pred_fallthru
        _
      // Predicated region
      $region21: #{decoder_bottleneck_forward.5} parent=11 // pred_check
        %p174 = pneg %p101
      $region22: #{decoder_bottleneck_forward.5} parent=11 // pred_check_branch
        %176 = sbr.rel (%p174) target = $region24
      $region23: #{decoder_bottleneck_forward.5} parent=11 // pred_region
        _
      $region24: #{decoder_bottleneck_forward.5} parent=11 // pred_fallthru
        _
    $region12: #{decoder_bottleneck_forward.5} parent=5 // pred_fallthru
      _
    %p177 = scmp.lt.s32.totalorder %s12, 2
    // Predicated region
    $region25: #{decoder_bottleneck_forward.5} parent=5 // pred_check
      %p178 = pneg %p177
    $region26: #{decoder_bottleneck_forward.5} parent=5 // pred_check_branch
      %180 = sbr.rel (%p178) target = $region28
    $region27: #{decoder_bottleneck_forward.5} parent=5 // pred_region
      // Predicated region
      $region29: #{decoder_bottleneck_forward.5} parent=27 // pred_check
        %p181 = pneg %p74
      $region30: #{decoder_bottleneck_forward.5} parent=27 // pred_check_branch
        %183 = sbr.rel (%p181) target = $region32
      $region31: #{decoder_bottleneck_forward.5} parent=27 // pred_region
        %p184 = scmp.lt.s32.totalorder %s12, 1
        %s185 = scalar_select %p184, %s12, 1
        %s186 = smul.addr %s185, 8
        %s187 = scalar_lea.vmem %s2, %s186
      $region32: #{decoder_bottleneck_forward.5} parent=27 // pred_fallthru
        _
    $region28: #{decoder_bottleneck_forward.5} parent=5 // pred_fallthru
      _
    %p188 = scmp.le.s32.totalorder 1, %s12
    %p189 = scmp.lt.s32.totalorder %s12, 3
    %p190 = pnand %p188, %p189
    %p191 = pneg %p190
    // Predicated region
    $region33: #{decoder_bottleneck_forward.5} parent=5 // pred_check
      _
    $region34: #{decoder_bottleneck_forward.5} parent=5 // pred_check_branch
      %193 = sbr.rel (%p190) target = $region36
    $region35: #{decoder_bottleneck_forward.5} parent=5 // pred_region
      %s194 = ssub.s32 %s12, 1
      %p195 = pneg %p33
      %p196 = pneg %p30
      %p197 = pneg %p54
      %p198 = pneg %p51
      %p199 = scmp.lt.s32.totalorder %s17, 1
      %s200 = scalar_select %p199, %s17, 1
      %s201 = smul.addr %s200, 8
      %s202 = scalar_lea.vmem %s2, %s201
      %p203 = pneg %p80
      %p204 = pneg %p77
      %p205 = pneg %p101
      %p206 = pneg %p98
      %p207 = pneg %p127
      %p208 = pneg %p124
      %p209 = scmp.lt.s32.totalorder %s17, 1
      %s210 = scalar_select %p209, %s17, 1
      %s211 = smul.addr %s210, 8
      %s212 = scalar_lea.vmem %s4, %s211
      %p213 = pneg %p153
      %p214 = pneg %p150
      %p215 = scmp.lt.s32.totalorder %s17, 1
      %s216 = scalar_select %p215, %s17, 1
      %s217 = smul.addr %s216, 8
      %s218 = scalar_lea.vmem %s5, %s217
      %p219 = scmp.lt.s32.totalorder %s17, 1
      %s220 = scalar_select %p219, %s17, 1
      %s221 = smul.addr %s220, 8
      %s222 = scalar_lea.vmem %s2, %s221
      %p223 = scmp.lt.s32.totalorder %s17, 1
      %s224 = scalar_select %p223, %s17, 1
      %s225 = smul.addr %s224, 8
      %s226 = scalar_lea.vmem %s4, %s225
      %p227 = scmp.lt.s32.totalorder %s17, 1
      %s228 = scalar_select %p227, %s17, 1
      %s229 = smul.addr %s228, 8
      %s230 = scalar_lea.vmem %s5, %s229
      %v231 = vld [vmem:[%s222] sm:$0xff]
      %v232 = vld [vmem:[%s0] sm:$0xff]
      %234 = vset.pattern.permute.xlu0 0
      %235 = vperm.xlu0 %234, %v232
      %v236 = vpop.permute.xlu0 %235
      %v238 = vmul.f32 %v231, %v236
      %239 = vset.pattern.permute.xlu0 1
      %240 = vperm.xlu0 %239, %v232
      %v241 = vpop.permute.xlu0 %240
      %v243 = vadd.f32 %v238, %v241
      %vm244 = vcmp.gt.f32.partialorder %v243, 0.0
      %v245 = vmin.f32 %v243, 0.0
      %v246 = vmul.f32 %v245, 1.442695
      %v247 = vpow.pop %v246
      %v248 = vsub.f32 %v247, 1.0
      %v249 = vsel %vm244, %v243, %v248
      %250 = vrot.lane.b32.xlu0 %v249, 1
      %v251 = vpop.permute.xlu0 %250
      %v252 = vld [vmem:[%s1] sm:$0x1]
      %v253 = vlaneseq
      %v254 = vshrl.u32 %v253, 7
      %v255 = vsub.s32 0, %v254
      %v256 = vrot.slane %v252, %v255
      %v257 = vmul.f32 %v251, %v256
      %258 = vrot.lane.b32.xlu0 %v249, 127
      %v259 = vpop.permute.xlu0 %258
      %v260 = vld [vmem:[%s1 + $0x1] sm:$0x1]
      %v261 = vlaneseq
      %v262 = vshrl.u32 %v261, 7
      %v263 = vsub.s32 0, %v262
      %v264 = vrot.slane %v260, %v263
      %v265 = vmul.f32 %v259, %v264
      %v266 = vld [vmem:[%s3] sm:$0xff]
      %vm267 = vcmask 195584
      %v269 = vsel %vm267, %v266, 0
      %271 = vmatprep.subr.mxu0 0.0
      %272 = vmatpush1.msra.mxu0 %v257
      %273 = vmatprep.subr.mxu0 0.0
      %274 = vmatpush1.msra.mxu0 %v249
      %275 = vmatprep.subr.mxu0 0.0
      %276 = vmatpush1.msra.mxu0 %v265
      %277 = vmatprep.subr.mxu0 0.0
      %278 = vmatpush1.msra.mxu0 0.0
      %279 = vmatprep.subr.mxu0 0.0
      %280 = vmatpush1.msra.mxu0 0.0
      %281 = vmatprep.subr.mxu0 0.0
      %282 = vmatpush1.msra.mxu0 0.0
      %283 = vmatprep.subr.mxu0 0.0
      %284 = vmatpush1.msra.mxu0 0.0
      %285 = vmatprep.subr.mxu0 0.0
      %286 = vmatpush1.msra.mxu0 0.0
      %287 = vmatprep.subr.mxu0 0.0
      %288 = vmatpush1.msra.mxu0 0.0
      %289 = vmatprep.subr.mxu0 0.0
      %290 = vmatpush1.msra.mxu0 0.0
      %291 = vmatprep.subr.mxu0 0.0
      %292 = vmatpush1.msra.mxu0 0.0
      %293 = vmatprep.subr.mxu0 0.0
      %294 = vmatpush1.msra.mxu0 0.0
      %295 = vmatprep.subr.mxu0 0.0
      %296 = vmatpush1.msra.mxu0 0.0
      %297 = vmatprep.subr.mxu0 0.0
      %298 = vmatpush1.msra.mxu0 0.0
      %299 = vmatprep.subr.mxu0 0.0
      %300 = vmatpush1.msra.mxu0 0.0
      %301 = vmatprep.subr.mxu0 0.0
      %302 = vmatpush1.msra.mxu0 0.0
      %303 = vmatprep.subr.mxu0 0.0
      %304 = vmatpush1.msra.mxu0 0.0
      %305 = vmatprep.subr.mxu0 0.0
      %306 = vmatpush1.msra.mxu0 0.0
      %307 = vmatprep.subr.mxu0 0.0
      %308 = vmatpush1.msra.mxu0 0.0
      %309 = vmatprep.subr.mxu0 0.0
      %310 = vmatpush1.msra.mxu0 0.0
      %311 = vmatprep.subr.mxu0 0.0
      %312 = vmatpush1.msra.mxu0 0.0
      %313 = vmatprep.subr.mxu0 0.0
      %314 = vmatpush1.msra.mxu0 0.0
      %315 = vmatprep.subr.mxu0 0.0
      %316 = vmatpush1.msra.mxu0 0.0
      %317 = vmatprep.subr.mxu0 0.0
      %318 = vmatpush1.msra.mxu0 0.0
      %319 = vmatprep.subr.mxu0 0.0
      %320 = vmatpush1.msra.mxu0 0.0
      %321 = vmatprep.subr.mxu0 0.0
      %322 = vmatpush1.msra.mxu0 0.0
      %323 = vmatprep.subr.mxu0 0.0
      %324 = vmatpush1.msra.mxu0 0.0
      %325 = vmatprep.subr.mxu0 0.0
      %326 = vmatpush1.msra.mxu0 0.0
      %327 = vmatprep.subr.mxu0 0.0
      %328 = vmatpush1.msra.mxu0 0.0
      %329 = vmatprep.subr.mxu0 0.0
      %330 = vmatpush1.msra.mxu0 0.0
      %331 = vmatprep.subr.mxu0 0.0
      %332 = vmatpush1.msra.mxu0 0.0
      %333 = vmatprep.subr.mxu0 0.0
      %334 = vmatpush1.msra.mxu0 0.0
      %335 = vmatprep.mubr.f32.mxu0 0.0
      %336 = vmatmul.mubr.f32.gmra.mrb[0].mxu0 %v269
      %v337 = vpop.f32.mrb[0].mxu0
      %v338 = vadd.f32 0.0, %v337
      %v339 = vpop.f32.mrb[0].mxu0
      %340 = vdwg.mxu0
      %341 = vadd.xlane.f32.xlu0 %v338
      %v342 = vpop.xlane.xlu0 %341
      %vm343 = vcmask 7168
      %344 = vst.msk [vmem:[%s230] sm:$0xff] %vm343, %v342
      %v345 = vmul.f32 %v338, %v338
      %346 = vadd.xlane.f32.xlu0 %v345
      %v347 = vpop.xlane.xlu0 %346
      %vm348 = vcmask 15368
      %349 = vst.msk [vmem:[%s230] sm:$0xff] %vm348, %v347
      %350 = vst [vmem:[%s226] sm:$0xff] %v338
      %p351 = scmp.lt.s32.totalorder %s17, 1
      %s352 = scalar_select %p351, %s17, 1
      %s353 = smul.addr %s352, 8
      %s354 = scalar_lea.vmem %s4, %s353
      %p355 = scmp.lt.s32.totalorder %s17, 1
      %s356 = scalar_select %p355, %s17, 1
      %s357 = smul.addr %s356, 8
      %s358 = scalar_lea.vmem %s5, %s357
      // Predicated region
      $region37: #{decoder_bottleneck_forward.5} parent=35 // pred_check
        %p359 = pneg %p124
      $region38: #{decoder_bottleneck_forward.5} parent=35 // pred_check_branch
        %361 = sbr.rel (%p359) target = $region40
      $region39: #{decoder_bottleneck_forward.5} parent=35 // pred_region
        _
      $region40: #{decoder_bottleneck_forward.5} parent=35 // pred_fallthru
        _
      // Predicated region
      $region41: #{decoder_bottleneck_forward.5} parent=35 // pred_check
        %p362 = pneg %p150
      $region42: #{decoder_bottleneck_forward.5} parent=35 // pred_check_branch
        %364 = sbr.rel (%p362) target = $region44
      $region43: #{decoder_bottleneck_forward.5} parent=35 // pred_region
        _
      $region44: #{decoder_bottleneck_forward.5} parent=35 // pred_fallthru
        _
    $region36: #{decoder_bottleneck_forward.5} parent=5 // pred_fallthru
      _
    %p365 = scmp.le.s32.totalorder 2, %s12
    // Predicated region
    $region45: #{decoder_bottleneck_forward.5} parent=5 // pred_check
      %p366 = pneg %p365
    $region46: #{decoder_bottleneck_forward.5} parent=5 // pred_check_branch
      %368 = sbr.rel (%p366) target = $region48
    $region47: #{decoder_bottleneck_forward.5} parent=5 // pred_region
      %s369 = ssub.s32 %s12, 2
      // Predicated region
      $region49: #{decoder_bottleneck_forward.5} parent=47 // pred_check
        %p370 = pneg %p130
      $region50: #{decoder_bottleneck_forward.5} parent=47 // pred_check_branch
        %372 = sbr.rel (%p370) target = $region52
      $region51: #{decoder_bottleneck_forward.5} parent=47 // pred_region
        %p373 = scmp.lt.s32.totalorder %s18, 1
        %s374 = scalar_select %p373, %s18, 1
        %s375 = smul.addr %s374, 8
        %s376 = scalar_lea.vmem %s4, %s375
      $region52: #{decoder_bottleneck_forward.5} parent=47 // pred_fallthru
        _
      // Predicated region
      $region53: #{decoder_bottleneck_forward.5} parent=47 // pred_check
        %p377 = pneg %p156
      $region54: #{decoder_bottleneck_forward.5} parent=47 // pred_check_branch
        %379 = sbr.rel (%p377) target = $region56
      $region55: #{decoder_bottleneck_forward.5} parent=47 // pred_region
        %p380 = scmp.lt.s32.totalorder %s18, 1
        %s381 = scalar_select %p380, %s18, 1
        %s382 = smul.addr %s381, 8
        %s383 = scalar_lea.vmem %s5, %s382
      $region56: #{decoder_bottleneck_forward.5} parent=47 // pred_fallthru
        _
    $region48: #{decoder_bottleneck_forward.5} parent=5 // pred_fallthru
      _
  $region6: #{decoder_bottleneck_forward.5} parent=0 // loop_footer
    %s16 = sadd.s32 1, %s12
  $region7: #{decoder_bottleneck_forward.5} parent=0 // loop_footer_branch
    %11 = sbr.rel target = $region3
  $region8: #{decoder_bottleneck_forward.5} parent=0 // loop_exit
    _

// kernel: decoder_bottleneck_forward.7
$region0: #{decoder_bottleneck_forward.7}
  #allocation0 [shape = 'u32[]', space=smem, size = 0x4, offset = 0x4, fixed_abs, tag = 'smem constant byte address 0x4 - core index']
  #allocation1 [shape = 'u32[144,128]{1,0:T(1,128)}', space=vmem, size = 0x12000, scoped, tag = 'internal scratch']
  %s0 = inlined_call_operand.vmem [shape: f32[32,2], index: 0, kind: input, shape index: {}]
  %s1 = inlined_call_operand.vmem [shape: f32[32,256], index: 1, kind: input, shape index: {}]
  %s2 = inlined_call_operand.vmem [shape: f32[32,256], index: 2, kind: input, shape index: {}]
  %s3 = inlined_call_operand.vmem [shape: f32[32,256], index: 3, kind: output, shape index: {}]
  %s4 = sld [smem:[#allocation0]]
  $region155: #{decoder_bottleneck_forward.7} parent=0
    _
  %s6 = ssub.s32 1, %s4
  %s7 = scalar_select 0, %s6, %s4
  $region1: #{decoder_bottleneck_forward.7} parent=0
    #allocation2 [shape = 'u8[32768]{0}', space=vmem, size = 0x8000, scoped, tag = 'input window, operand 1']
    #allocation3 [shape = 'u8[32768]{0}', space=vmem, size = 0x8000, scoped, tag = 'input window, operand 2']
    #allocation4 [shape = 'u8[32768]{0}', space=vmem, size = 0x8000, scoped, tag = 'output window, operand 0']
    loop: start=0, step=1, limit=4
    $region2: #{decoder_bottleneck_forward.7} parent=1 // loop_pre_header
      _
    $region3: #{decoder_bottleneck_forward.7} parent=1 // loop_header
      %s9 = sphi 0, %s13
      %p10 = scmp.ge.s32.totalorder %s9, 4
      %s17 = sphi 0, %s17
      %s19 = sphi 0, %s17
      %s20 = sphi 0, %s19
      %s34 = sphi 0, %s20
      %s40 = sphi 0, %s42
      %s43 = sphi 0, %s40
      %s44 = sphi 0, %s43
      %s60 = sphi 0, %s44
      %s66 = sphi 0, %s68
      %s69 = sphi 0, %s66
      %s70 = sphi 0, %s69
      %s86 = sphi 0, %s70
      %s92 = sphi 0, %s94
      %s95 = sphi 0, %s92
      %s96 = sphi 0, %s95
      %s112 = sphi 0, %s96
    $region4: #{decoder_bottleneck_forward.7} parent=1 // loop_header_branch
      %12 = sbr.rel (%p10) target = $region8
    $region5: #{decoder_bottleneck_forward.7} parent=1 // loop_body
      %s14 = ssub.s32 %s9, 1
      %s15 = ssub.s32 %s9, 2
      %s16 = sadd.s32 %s9, 1
      %s18 = sadd.s32 %s17, 1
      %p21 = scmp.eq.s32.totalorder %s9, 1
      %p22 = scmp.ne.s32.totalorder %s17, %s19
      %p23 = scmp.eq.s32.totalorder %s9, 0
      %p24 = por %p22, %p23
      %p25 = scmp.ne.s32.totalorder %s17, %s19
      %p26 = scmp.eq.s32.totalorder %s14, 1
      %p27 = por %p25, %p26
      %p28 = scmp.ne.s32.totalorder %s19, %s20
      %p29 = scmp.eq.s32.totalorder %s14, 0
      %p30 = por %p28, %p29
      %p31 = scmp.ne.s32.totalorder %s19, %s20
      %p32 = scmp.eq.s32.totalorder %s15, 1
      %p33 = por %p31, %p32
      %p35 = scmp.ne.s32.totalorder %s20, %s34
      %p36 = scmp.eq.s32.totalorder %s15, 0
      %p37 = por %p35, %p36
      %s38 = ssub.s32 %s9, %s16
      %p39 = scmp.eq.s32.totalorder %s38, 0
      %s41 = sadd.s32 %s40, 1
      %s42 = scalar_select %p39, %s40, %s41
      %p45 = pneg %p39
      %p46 = scmp.eq.s32.totalorder %s9, 1
      %p47 = por %p45, %p46
      %p48 = scmp.ne.s32.totalorder %s40, %s43
      %p49 = scmp.eq.s32.totalorder %s9, 0
      %p50 = por %p48, %p49
      %p51 = scmp.ne.s32.totalorder %s40, %s43
      %p52 = scmp.eq.s32.totalorder %s14, 1
      %p53 = por %p51, %p52
      %p54 = scmp.ne.s32.totalorder %s43, %s44
      %p55 = scmp.eq.s32.totalorder %s14, 0
      %p56 = por %p54, %p55
      %p57 = scmp.ne.s32.totalorder %s43, %s44
      %p58 = scmp.eq.s32.totalorder %s15, 1
      %p59 = por %p57, %p58
      %p61 = scmp.ne.s32.totalorder %s44, %s60
      %p62 = scmp.eq.s32.totalorder %s15, 0
      %p63 = por %p61, %p62
      %s64 = ssub.s32 %s9, %s16
      %p65 = scmp.eq.s32.totalorder %s64, 0
      %s67 = sadd.s32 %s66, 1
      %s68 = scalar_select %p65, %s66, %s67
      %p71 = pneg %p65
      %p72 = scmp.eq.s32.totalorder %s9, 1
      %p73 = por %p71, %p72
      %p74 = scmp.ne.s32.totalorder %s66, %s69
      %p75 = scmp.eq.s32.totalorder %s9, 0
      %p76 = por %p74, %p75
      %p77 = scmp.ne.s32.totalorder %s66, %s69
      %p78 = scmp.eq.s32.totalorder %s14, 1
      %p79 = por %p77, %p78
      %p80 = scmp.ne.s32.totalorder %s69, %s70
      %p81 = scmp.eq.s32.totalorder %s14, 0
      %p82 = por %p80, %p81
      %p83 = scmp.ne.s32.totalorder %s69, %s70
      %p84 = scmp.eq.s32.totalorder %s15, 1
      %p85 = por %p83, %p84
      %p87 = scmp.ne.s32.totalorder %s70, %s86
      %p88 = scmp.eq.s32.totalorder %s15, 0
      %p89 = por %p87, %p88
      %s90 = ssub.s32 %s9, %s16
      %p91 = scmp.eq.s32.totalorder %s90, 0
      %s93 = sadd.s32 %s92, 1
      %s94 = scalar_select %p91, %s92, %s93
      %p97 = pneg %p91
      %p98 = scmp.eq.s32.totalorder %s9, 1
      %p99 = por %p97, %p98
      %p100 = scmp.ne.s32.totalorder %s92, %s95
      %p101 = scmp.eq.s32.totalorder %s9, 0
      %p102 = por %p100, %p101
      %p103 = scmp.ne.s32.totalorder %s92, %s95
      %p104 = scmp.eq.s32.totalorder %s14, 1
      %p105 = por %p103, %p104
      %p106 = scmp.ne.s32.totalorder %s95, %s96
      %p107 = scmp.eq.s32.totalorder %s14, 0
      %p108 = por %p106, %p107
      %p109 = scmp.ne.s32.totalorder %s95, %s96
      %p110 = scmp.eq.s32.totalorder %s15, 1
      %p111 = por %p109, %p110
      %p113 = scmp.ne.s32.totalorder %s96, %s112
      %p114 = scmp.eq.s32.totalorder %s15, 0
      %p115 = por %p113, %p114
      %p116 = scmp.le.s32.totalorder 1, %s9
      %p117 = scmp.lt.s32.totalorder %s9, 3
      %p118 = pnand %p116, %p117
      %p119 = pneg %p118
      // Predicated region
      $region9: #{decoder_bottleneck_forward.7} parent=5 // pred_check
        _
      $region10: #{decoder_bottleneck_forward.7} parent=5 // pred_check_branch
        %121 = sbr.rel (%p118) target = $region12
      $region11: #{decoder_bottleneck_forward.7} parent=5 // pred_region
        %s122 = ssub.s32 %s9, 1
        // Predicated region
        $region13: #{decoder_bottleneck_forward.7} parent=11 // pred_check
          %p123 = pneg %p30
        $region14: #{decoder_bottleneck_forward.7} parent=11 // pred_check_branch
          %125 = sbr.rel (%p123) target = $region16
        $region15: #{decoder_bottleneck_forward.7} parent=11 // pred_region
          _
        $region16: #{decoder_bottleneck_forward.7} parent=11 // pred_fallthru
          _
      $region12: #{decoder_bottleneck_forward.7} parent=5 // pred_fallthru
        _
      %p126 = scmp.lt.s32.totalorder %s9, 2
      // Predicated region
      $region17: #{decoder_bottleneck_forward.7} parent=5 // pred_check
        %p127 = pneg %p126
      $region18: #{decoder_bottleneck_forward.7} parent=5 // pred_check_branch
        %129 = sbr.rel (%p127) target = $region20
      $region19: #{decoder_bottleneck_forward.7} parent=5 // pred_region
        // Predicated region
        $region21: #{decoder_bottleneck_forward.7} parent=19 // pred_check
          %p130 = pneg %p50
        $region22: #{decoder_bottleneck_forward.7} parent=19 // pred_check_branch
          %132 = sbr.rel (%p130) target = $region24
        $region23: #{decoder_bottleneck_forward.7} parent=19 // pred_region
          %s133 = sand.u32 %s40, 1
          %s134 = sand.u32 %s40, 1
          %s135 = smul.addr %s134, 32
          %s136 = scalar_lea.vmem [#allocation2], %s135
          %s137 = smul.addr %s9, 8
          %s138 = scalar_lea.vmem %s1, %s137
          // Predicated region
          $region25: #{decoder_bottleneck_forward.7} parent=23 // pred_check
            _
          $region26: #{decoder_bottleneck_forward.7} parent=23 // pred_check_branch
            %140 = sbr.rel (0) target = $region28
          $region27: #{decoder_bottleneck_forward.7} parent=23 // pred_region
            // Predicated region
            $region29: #{decoder_bottleneck_forward.7} parent=27 // pred_check
              _
            $region30: #{decoder_bottleneck_forward.7} parent=27 // pred_check_branch
              %142 = sbr.rel (0) target = $region32
            $region31: #{decoder_bottleneck_forward.7} parent=27 // pred_region
              // Predicated region
              $region44: #{decoder_bottleneck_forward.7} parent=31 // pred_check
                _
              $region45: #{decoder_bottleneck_forward.7} parent=31 // pred_check_branch
                %163 = sbr.rel (0) target = $region47
              $region46: #{decoder_bottleneck_forward.7} parent=31 // pred_region
                loop: start=0, step=1, limit=1
                $region48: #{decoder_bottleneck_forward.7} parent=46 // loop_pre_header
                  _
                $region49: #{decoder_bottleneck_forward.7} parent=46 // loop_header
                  %s165 = sphi 0, %s169
                  %p166 = scmp.ge.s32.totalorder %s165, 1
                  %s170 = sphi %s138, %s138
                  %s171 = sphi %s136, %s136
                $region50: #{decoder_bottleneck_forward.7} parent=46 // loop_header_branch
                  %168 = sbr.rel (%p166) target = $region54
                $region51: #{decoder_bottleneck_forward.7} parent=46 // loop_body
                  %v172 = vld [vmem:[%s170] sm:$0xff]
                  %173 = vst [vmem:[%s171] sm:$0xff] %v172
                  %v174 = vld [vmem:[%s170 + $0x10] sm:$0xff]
                  %175 = vst [vmem:[%s171 + $0x8] sm:$0xff] %v174
                  %v176 = vld [vmem:[%s170 + $0x20] sm:$0xff]
                  %177 = vst [vmem:[%s171 + $0x10] sm:$0xff] %v176
                  %v178 = vld [vmem:[%s170 + $0x30] sm:$0xff]
                  %179 = vst [vmem:[%s171 + $0x18] sm:$0xff] %v178
                $region52: #{decoder_bottleneck_forward.7} parent=46 // loop_footer
                  %s169 = sadd.s32 1, %s165
                $region53: #{decoder_bottleneck_forward.7} parent=46 // loop_footer_branch
                  %164 = sbr.rel target = $region49
                $region54: #{decoder_bottleneck_forward.7} parent=46 // loop_exit
                  _
              $region47: #{decoder_bottleneck_forward.7} parent=31 // pred_fallthru
                _
              // Predicated region
              $region55: #{decoder_bottleneck_forward.7} parent=31 // pred_check
                _
              $region56: #{decoder_bottleneck_forward.7} parent=31 // pred_check_branch
                %181 = sbr.rel target = $region58
              $region57: #{decoder_bottleneck_forward.7} parent=31 // pred_region
                _
              $region58: #{decoder_bottleneck_forward.7} parent=31 // pred_fallthru
                _
            $region32: #{decoder_bottleneck_forward.7} parent=27 // pred_fallthru
              _
            // Predicated region
            $region33: #{decoder_bottleneck_forward.7} parent=27 // pred_check
              _
            $region34: #{decoder_bottleneck_forward.7} parent=27 // pred_check_branch
              %144 = sbr.rel target = $region36
            $region35: #{decoder_bottleneck_forward.7} parent=27 // pred_region
              loop: start=0, step=1, limit=1
              $region37: #{decoder_bottleneck_forward.7} parent=35 // loop_pre_header
                _
              $region38: #{decoder_bottleneck_forward.7} parent=35 // loop_header
                %s147 = sphi 0, %s151
                %p148 = scmp.ge.s32.totalorder %s147, 1
                %s152 = sphi %s138, %s138
                %s153 = sphi %s136, %s136
              $region39: #{decoder_bottleneck_forward.7} parent=35 // loop_header_branch
                %150 = sbr.rel (%p148) target = $region43
              $region40: #{decoder_bottleneck_forward.7} parent=35 // loop_body
                %v154 = vld [vmem:[%s152] sm:$0xff]
                %155 = vst [vmem:[%s153] sm:$0xff] %v154
                %v156 = vld [vmem:[%s152 + $0x10] sm:$0xff]
                %157 = vst [vmem:[%s153 + $0x8] sm:$0xff] %v156
                %v158 = vld [vmem:[%s152 + $0x20] sm:$0xff]
                %159 = vst [vmem:[%s153 + $0x10] sm:$0xff] %v158
                %v160 = vld [vmem:[%s152 + $0x30] sm:$0xff]
                %161 = vst [vmem:[%s153 + $0x18] sm:$0xff] %v160
              $region41: #{decoder_bottleneck_forward.7} parent=35 // loop_footer
                %s151 = sadd.s32 1, %s147
              $region42: #{decoder_bottleneck_forward.7} parent=35 // loop_footer_branch
                %146 = sbr.rel target = $region38
              $region43: #{decoder_bottleneck_forward.7} parent=35 // loop_exit
                _
            $region36: #{decoder_bottleneck_forward.7} parent=27 // pred_fallthru
              _
          $region28: #{decoder_bottleneck_forward.7} parent=23 // pred_fallthru
            _
          %182 = vnop
        $region24: #{decoder_bottleneck_forward.7} parent=19 // pred_fallthru
          _
        // Predicated region
        $region59: #{decoder_bottleneck_forward.7} parent=19 // pred_check
          %p183 = pneg %p76
        $region60: #{decoder_bottleneck_forward.7} parent=19 // pred_check_branch
          %185 = sbr.rel (%p183) target = $region62
        $region61: #{decoder_bottleneck_forward.7} parent=19 // pred_region
          %s186 = sand.u32 %s66, 1
          %s187 = sand.u32 %s66, 1
          %s188 = smul.addr %s187, 32
          %s189 = scalar_lea.vmem [#allocation3], %s188
          %s190 = smul.addr %s9, 8
          %s191 = scalar_lea.vmem %s2, %s190
          // Predicated region
          $region63: #{decoder_bottleneck_forward.7} parent=61 // pred_check
            _
          $region64: #{decoder_bottleneck_forward.7} parent=61 // pred_check_branch
            %193 = sbr.rel (0) target = $region66
          $region65: #{decoder_bottleneck_forward.7} parent=61 // pred_region
            // Predicated region
            $region67: #{decoder_bottleneck_forward.7} parent=65 // pred_check
              _
            $region68: #{decoder_bottleneck_forward.7} parent=65 // pred_check_branch
              %195 = sbr.rel (0) target = $region70
            $region69: #{decoder_bottleneck_forward.7} parent=65 // pred_region
              // Predicated region
              $region82: #{decoder_bottleneck_forward.7} parent=69 // pred_check
                _
              $region83: #{decoder_bottleneck_forward.7} parent=69 // pred_check_branch
                %216 = sbr.rel (0) target = $region85
              $region84: #{decoder_bottleneck_forward.7} parent=69 // pred_region
                loop: start=0, step=1, limit=1
                $region86: #{decoder_bottleneck_forward.7} parent=84 // loop_pre_header
                  _
                $region87: #{decoder_bottleneck_forward.7} parent=84 // loop_header
                  %s218 = sphi 0, %s222
                  %p219 = scmp.ge.s32.totalorder %s218, 1
                  %s223 = sphi %s191, %s191
                  %s224 = sphi %s189, %s189
                $region88: #{decoder_bottleneck_forward.7} parent=84 // loop_header_branch
                  %221 = sbr.rel (%p219) target = $region92
                $region89: #{decoder_bottleneck_forward.7} parent=84 // loop_body
                  %v225 = vld [vmem:[%s223] sm:$0xff]
                  %226 = vst [vmem:[%s224] sm:$0xff] %v225
                  %v227 = vld [vmem:[%s223 + $0x10] sm:$0xff]
                  %228 = vst [vmem:[%s224 + $0x8] sm:$0xff] %v227
                  %v229 = vld [vmem:[%s223 + $0x20] sm:$0xff]
                  %230 = vst [vmem:[%s224 + $0x10] sm:$0xff] %v229
                  %v231 = vld [vmem:[%s223 + $0x30] sm:$0xff]
                  %232 = vst [vmem:[%s224 + $0x18] sm:$0xff] %v231
                $region90: #{decoder_bottleneck_forward.7} parent=84 // loop_footer
                  %s222 = sadd.s32 1, %s218
                $region91: #{decoder_bottleneck_forward.7} parent=84 // loop_footer_branch
                  %217 = sbr.rel target = $region87
                $region92: #{decoder_bottleneck_forward.7} parent=84 // loop_exit
                  _
              $region85: #{decoder_bottleneck_forward.7} parent=69 // pred_fallthru
                _
              // Predicated region
              $region93: #{decoder_bottleneck_forward.7} parent=69 // pred_check
                _
              $region94: #{decoder_bottleneck_forward.7} parent=69 // pred_check_branch
                %234 = sbr.rel target = $region96
              $region95: #{decoder_bottleneck_forward.7} parent=69 // pred_region
                _
              $region96: #{decoder_bottleneck_forward.7} parent=69 // pred_fallthru
                _
            $region70: #{decoder_bottleneck_forward.7} parent=65 // pred_fallthru
              _
            // Predicated region
            $region71: #{decoder_bottleneck_forward.7} parent=65 // pred_check
              _
            $region72: #{decoder_bottleneck_forward.7} parent=65 // pred_check_branch
              %197 = sbr.rel target = $region74
            $region73: #{decoder_bottleneck_forward.7} parent=65 // pred_region
              loop: start=0, step=1, limit=1
              $region75: #{decoder_bottleneck_forward.7} parent=73 // loop_pre_header
                _
              $region76: #{decoder_bottleneck_forward.7} parent=73 // loop_header
                %s200 = sphi 0, %s204
                %p201 = scmp.ge.s32.totalorder %s200, 1
                %s205 = sphi %s191, %s191
                %s206 = sphi %s189, %s189
              $region77: #{decoder_bottleneck_forward.7} parent=73 // loop_header_branch
                %203 = sbr.rel (%p201) target = $region81
              $region78: #{decoder_bottleneck_forward.7} parent=73 // loop_body
                %v207 = vld [vmem:[%s205] sm:$0xff]
                %208 = vst [vmem:[%s206] sm:$0xff] %v207
                %v209 = vld [vmem:[%s205 + $0x10] sm:$0xff]
                %210 = vst [vmem:[%s206 + $0x8] sm:$0xff] %v209
                %v211 = vld [vmem:[%s205 + $0x20] sm:$0xff]
                %212 = vst [vmem:[%s206 + $0x10] sm:$0xff] %v211
                %v213 = vld [vmem:[%s205 + $0x30] sm:$0xff]
                %214 = vst [vmem:[%s206 + $0x18] sm:$0xff] %v213
              $region79: #{decoder_bottleneck_forward.7} parent=73 // loop_footer
                %s204 = sadd.s32 1, %s200
              $region80: #{decoder_bottleneck_forward.7} parent=73 // loop_footer_branch
                %199 = sbr.rel target = $region76
              $region81: #{decoder_bottleneck_forward.7} parent=73 // loop_exit
                _
            $region74: #{decoder_bottleneck_forward.7} parent=65 // pred_fallthru
              _
          $region66: #{decoder_bottleneck_forward.7} parent=61 // pred_fallthru
            _
          %235 = vnop
        $region62: #{decoder_bottleneck_forward.7} parent=19 // pred_fallthru
          _
      $region20: #{decoder_bottleneck_forward.7} parent=5 // pred_fallthru
        _
      %p236 = scmp.le.s32.totalorder 1, %s9
      %p237 = scmp.lt.s32.totalorder %s9, 3
      %p238 = pnand %p236, %p237
      %p239 = pneg %p238
      // Predicated region
      $region97: #{decoder_bottleneck_forward.7} parent=5 // pred_check
        _
      $region98: #{decoder_bottleneck_forward.7} parent=5 // pred_check_branch
        %241 = sbr.rel (%p238) target = $region100
      $region99: #{decoder_bottleneck_forward.7} parent=5 // pred_region
        %s242 = ssub.s32 %s9, 1
        %s243 = sand.u32 %s43, 1
        %s244 = sand.u32 %s43, 1
        %s245 = smul.addr %s244, 32
        %s246 = scalar_lea.vmem [#allocation2], %s245
        // Predicated region
        $region101: #{decoder_bottleneck_forward.7} parent=99 // pred_check
          %p247 = pneg %p56
        $region102: #{decoder_bottleneck_forward.7} parent=99 // pred_check_branch
          %249 = sbr.rel (%p247) target = $region104
        $region103: #{decoder_bottleneck_forward.7} parent=99 // pred_region
          _
        $region104: #{decoder_bottleneck_forward.7} parent=99 // pred_fallthru
          _
        %s250 = sand.u32 %s69, 1
        %s251 = sand.u32 %s69, 1
        %s252 = smul.addr %s251, 32
        %s253 = scalar_lea.vmem [#allocation3], %s252
        // Predicated region
        $region105: #{decoder_bottleneck_forward.7} parent=99 // pred_check
          %p254 = pneg %p82
        $region106: #{decoder_bottleneck_forward.7} parent=99 // pred_check_branch
          %256 = sbr.rel (%p254) target = $region108
        $region107: #{decoder_bottleneck_forward.7} parent=99 // pred_region
          _
        $region108: #{decoder_bottleneck_forward.7} parent=99 // pred_fallthru
          _
        %p257 = pneg %p30
        %p258 = pneg %p27
        %s259 = sand.u32 %s43, 1
        %s260 = sand.u32 %s43, 1
        %s261 = smul.addr %s260, 32
        %s262 = scalar_lea.vmem [#allocation2], %s261
        %p263 = pneg %p56
        %p264 = pneg %p53
        %s265 = sand.u32 %s69, 1
        %s266 = sand.u32 %s69, 1
        %s267 = smul.addr %s266, 32
        %s268 = scalar_lea.vmem [#allocation3], %s267
        %p269 = pneg %p82
        %p270 = pneg %p79
        %p271 = pneg %p108
        %p272 = pneg %p105
        %s273 = sand.u32 %s95, 1
        %s274 = sand.u32 %s95, 1
        %s275 = smul.addr %s274, 32
        %s276 = scalar_lea.vmem [#allocation4], %s275
        %v277 = vld [vmem:[%s246] sm:$0xff]
        %v278 = vld [vmem:[%s246 + $0x8] sm:$0xff]
        %v279 = vld [vmem:[%s246 + $0x10] sm:$0xff]
        %v280 = vld [vmem:[%s246 + $0x18] sm:$0xff]
        %v281 = vld [vmem:[%s0] sm:$0xff]
        %v282 = vld [vmem:[%s0 + $0x8] sm:$0xff]
        %v283 = vld [vmem:[%s0 + $0x10] sm:$0xff]
        %v284 = vld [vmem:[%s0 + $0x18] sm:$0xff]
        %286 = vset.pattern.permute.xlu0 0
        %287 = vperm.xlu0 %286, %v281
        %v288 = vpop.permute.xlu0 %287
        %291 = vset.pattern.permute.xlu0 0
        %292 = vperm.xlu0 %291, %v282
        %v293 = vpop.permute.xlu0 %292
        %296 = vset.pattern.permute.xlu0 0
        %297 = vperm.xlu0 %296, %v283
        %v298 = vpop.permute.xlu0 %297
        %301 = vset.pattern.permute.xlu0 0
        %302 = vperm.xlu0 %301, %v284
        %v303 = vpop.permute.xlu0 %302
        %v305 = vmul.f32 %v277, %v288
        %v306 = vmul.f32 %v278, %v293
        %v307 = vmul.f32 %v279, %v298
        %v308 = vmul.f32 %v280, %v303
        %309 = vset.pattern.permute.xlu0 1
        %310 = vperm.xlu0 %309, %v281
        %v311 = vpop.permute.xlu0 %310
        %313 = vset.pattern.permute.xlu0 1
        %314 = vperm.xlu0 %313, %v282
        %v315 = vpop.permute.xlu0 %314
        %317 = vset.pattern.permute.xlu0 1
        %318 = vperm.xlu0 %317, %v283
        %v319 = vpop.permute.xlu0 %318
        %321 = vset.pattern.permute.xlu0 1
        %322 = vperm.xlu0 %321, %v284
        %v323 = vpop.permute.xlu0 %322
        %v325 = vadd.f32 %v305, %v311
        %v326 = vadd.f32 %v306, %v315
        %v327 = vadd.f32 %v307, %v319
        %v328 = vadd.f32 %v308, %v323
        %v329 = vld [vmem:[%s253] sm:$0xff]
        %v330 = vld [vmem:[%s253 + $0x8] sm:$0xff]
        %v331 = vld [vmem:[%s253 + $0x10] sm:$0xff]
        %v332 = vld [vmem:[%s253 + $0x18] sm:$0xff]
        %v333 = vadd.f32 %v325, %v329
        %v334 = vadd.f32 %v326, %v330
        %v335 = vadd.f32 %v327, %v331
        %v336 = vadd.f32 %v328, %v332
        %vm337 = vcmp.gt.f32.partialorder %v333, 0.0
        %vm338 = vcmp.gt.f32.partialorder %v334, 0.0
        %vm339 = vcmp.gt.f32.partialorder %v335, 0.0
        %vm340 = vcmp.gt.f32.partialorder %v336, 0.0
        %v341 = vmin.f32 %v333, 0.0
        %v342 = vmin.f32 %v334, 0.0
        %v343 = vmin.f32 %v335, 0.0
        %v344 = vmin.f32 %v336, 0.0
        %v345 = vmul.f32 %v341, 1.442695
        %v346 = vpow.pop %v345
        %v347 = vmul.f32 %v342, 1.442695
        %v348 = vpow.pop %v347
        %v349 = vmul.f32 %v343, 1.442695
        %v350 = vpow.pop %v349
        %v351 = vmul.f32 %v344, 1.442695
        %v352 = vpow.pop %v351
        %v353 = vsub.f32 %v346, 1.0
        %v354 = vsub.f32 %v348, 1.0
        %v355 = vsub.f32 %v350, 1.0
        %v356 = vsub.f32 %v352, 1.0
        %v357 = vsel %vm337, %v333, %v353
        %v358 = vsel %vm338, %v334, %v354
        %v359 = vsel %vm339, %v335, %v355
        %v360 = vsel %vm340, %v336, %v356
        %361 = vst [vmem:[%s276] sm:$0xff] %v357
        %362 = vst [vmem:[%s276 + $0x8] sm:$0xff] %v358
        %363 = vst [vmem:[%s276 + $0x10] sm:$0xff] %v359
        %364 = vst [vmem:[%s276 + $0x18] sm:$0xff] %v360
        %s365 = sand.u32 %s95, 1
        %s366 = sand.u32 %s95, 1
        %s367 = smul.addr %s366, 32
        %s368 = scalar_lea.vmem [#allocation4], %s367
        // Predicated region
        $region109: #{decoder_bottleneck_forward.7} parent=99 // pred_check
          %p369 = pneg %p105
        $region110: #{decoder_bottleneck_forward.7} parent=99 // pred_check_branch
          %371 = sbr.rel (%p369) target = $region112
        $region111: #{decoder_bottleneck_forward.7} parent=99 // pred_region
          %s372 = smul.addr %s14, 8
          %s373 = scalar_lea.vmem %s3, %s372
          // Predicated region
          $region113: #{decoder_bottleneck_forward.7} parent=111 // pred_check
            _
          $region114: #{decoder_bottleneck_forward.7} parent=111 // pred_check_branch
            %375 = sbr.rel (0) target = $region116
          $region115: #{decoder_bottleneck_forward.7} parent=111 // pred_region
            // Predicated region
            $region117: #{decoder_bottleneck_forward.7} parent=115 // pred_check
              _
            $region118: #{decoder_bottleneck_forward.7} parent=115 // pred_check_branch
              %377 = sbr.rel (0) target = $region120
            $region119: #{decoder_bottleneck_forward.7} parent=115 // pred_region
              // Predicated region
              $region132: #{decoder_bottleneck_forward.7} parent=119 // pred_check
                _
              $region133: #{decoder_bottleneck_forward.7} parent=119 // pred_check_branch
                %398 = sbr.rel (0) target = $region135
              $region134: #{decoder_bottleneck_forward.7} parent=119 // pred_region
                loop: start=0, step=1, limit=1
                $region136: #{decoder_bottleneck_forward.7} parent=134 // loop_pre_header
                  _
                $region137: #{decoder_bottleneck_forward.7} parent=134 // loop_header
                  %s400 = sphi 0, %s404
                  %p401 = scmp.ge.s32.totalorder %s400, 1
                  %s405 = sphi %s368, %s368
                  %s406 = sphi %s373, %s373
                $region138: #{decoder_bottleneck_forward.7} parent=134 // loop_header_branch
                  %403 = sbr.rel (%p401) target = $region142
                $region139: #{decoder_bottleneck_forward.7} parent=134 // loop_body
                  %v407 = vld [vmem:[%s405] sm:$0xff]
                  %408 = vst [vmem:[%s406] sm:$0xff] %v407
                  %v409 = vld [vmem:[%s405 + $0x8] sm:$0xff]
                  %410 = vst [vmem:[%s406 + $0x10] sm:$0xff] %v409
                  %v411 = vld [vmem:[%s405 + $0x10] sm:$0xff]
                  %412 = vst [vmem:[%s406 + $0x20] sm:$0xff] %v411
                  %v413 = vld [vmem:[%s405 + $0x18] sm:$0xff]
                  %414 = vst [vmem:[%s406 + $0x30] sm:$0xff] %v413
                $region140: #{decoder_bottleneck_forward.7} parent=134 // loop_footer
                  %s404 = sadd.s32 1, %s400
                $region141: #{decoder_bottleneck_forward.7} parent=134 // loop_footer_branch
                  %399 = sbr.rel target = $region137
                $region142: #{decoder_bottleneck_forward.7} parent=134 // loop_exit
                  _
              $region135: #{decoder_bottleneck_forward.7} parent=119 // pred_fallthru
                _
              // Predicated region
              $region143: #{decoder_bottleneck_forward.7} parent=119 // pred_check
                _
              $region144: #{decoder_bottleneck_forward.7} parent=119 // pred_check_branch
                %416 = sbr.rel target = $region146
              $region145: #{decoder_bottleneck_forward.7} parent=119 // pred_region
                _
              $region146: #{decoder_bottleneck_forward.7} parent=119 // pred_fallthru
                _
            $region120: #{decoder_bottleneck_forward.7} parent=115 // pred_fallthru
              _
            // Predicated region
            $region121: #{decoder_bottleneck_forward.7} parent=115 // pred_check
              _
            $region122: #{decoder_bottleneck_forward.7} parent=115 // pred_check_branch
              %379 = sbr.rel target = $region124
            $region123: #{decoder_bottleneck_forward.7} parent=115 // pred_region
              loop: start=0, step=1, limit=1
              $region125: #{decoder_bottleneck_forward.7} parent=123 // loop_pre_header
                _
              $region126: #{decoder_bottleneck_forward.7} parent=123 // loop_header
                %s382 = sphi 0, %s386
                %p383 = scmp.ge.s32.totalorder %s382, 1
                %s387 = sphi %s368, %s368
                %s388 = sphi %s373, %s373
              $region127: #{decoder_bottleneck_forward.7} parent=123 // loop_header_branch
                %385 = sbr.rel (%p383) target = $region131
              $region128: #{decoder_bottleneck_forward.7} parent=123 // loop_body
                %v389 = vld [vmem:[%s387] sm:$0xff]
                %390 = vst [vmem:[%s388] sm:$0xff] %v389
                %v391 = vld [vmem:[%s387 + $0x8] sm:$0xff]
                %392 = vst [vmem:[%s388 + $0x10] sm:$0xff] %v391
                %v393 = vld [vmem:[%s387 + $0x10] sm:$0xff]
                %394 = vst [vmem:[%s388 + $0x20] sm:$0xff] %v393
                %v395 = vld [vmem:[%s387 + $0x18] sm:$0xff]
                %396 = vst [vmem:[%s388 + $0x30] sm:$0xff] %v395
              $region129: #{decoder_bottleneck_forward.7} parent=123 // loop_footer
                %s386 = sadd.s32 1, %s382
              $region130: #{decoder_bottleneck_forward.7} parent=123 // loop_footer_branch
                %381 = sbr.rel target = $region126
              $region131: #{decoder_bottleneck_forward.7} parent=123 // loop_exit
                _
            $region124: #{decoder_bottleneck_forward.7} parent=115 // pred_fallthru
              _
          $region116: #{decoder_bottleneck_forward.7} parent=111 // pred_fallthru
            _
          %417 = vnop
        $region112: #{decoder_bottleneck_forward.7} parent=99 // pred_fallthru
          _
      $region100: #{decoder_bottleneck_forward.7} parent=5 // pred_fallthru
        _
      %p418 = scmp.le.s32.totalorder 2, %s9
      // Predicated region
      $region147: #{decoder_bottleneck_forward.7} parent=5 // pred_check
        %p419 = pneg %p418
      $region148: #{decoder_bottleneck_forward.7} parent=5 // pred_check_branch
        %421 = sbr.rel (%p419) target = $region150
      $region149: #{decoder_bottleneck_forward.7} parent=5 // pred_region
        %s422 = ssub.s32 %s9, 2
        // Predicated region
        $region151: #{decoder_bottleneck_forward.7} parent=149 // pred_check
          %p423 = pneg %p111
        $region152: #{decoder_bottleneck_forward.7} parent=149 // pred_check_branch
          %425 = sbr.rel (%p423) target = $region154
        $region153: #{decoder_bottleneck_forward.7} parent=149 // pred_region
          %s426 = sand.u32 %s96, 1
          %s427 = sand.u32 %s96, 1
          %s428 = smul.addr %s427, 32
          %s429 = scalar_lea.vmem [#allocation4], %s428
        $region154: #{decoder_bottleneck_forward.7} parent=149 // pred_fallthru
          _
      $region150: #{decoder_bottleneck_forward.7} parent=5 // pred_fallthru
        _
    $region6: #{decoder_bottleneck_forward.7} parent=1 // loop_footer
      %s13 = sadd.s32 1, %s9
    $region7: #{decoder_bottleneck_forward.7} parent=1 // loop_footer_branch
      %8 = sbr.rel target = $region3
    $region8: #{decoder_bottleneck_forward.7} parent=1 // loop_exit
      _

</llo_original>
